<compile_context>
chip_gen: v5e
topology: v5e:2x2
jax: 0.10.0
libtpu: 0.0.40
codegen_flags: <defaults>
</compile_context>

<pallas_src>
import functools

import jax
import jax.numpy as jnp
import numpy as np
from jax import lax
from jax.experimental import pallas as pl
from jax.experimental.pallas import tpu as pltpu


# ----------------------------------------------------------------------------
# Kernel 1: hoisted input projection  gates_x = x @ W_ih^T + (b_ih + b_hh)
# ----------------------------------------------------------------------------
def input_proj_kernel(x_ref, w_ref, b_ref, g_ref):
    """(rows, D) @ (D, 4H) + (1, 4H) -> (rows, 4H), f32 accumulation."""
    x = x_ref[...].astype(w_ref.dtype)            # bf16 operands on v6e/v7x path
    g_ref[...] = (jnp.dot(x, w_ref[...], preferred_element_type=jnp.float32)
                  + b_ref[...]).astype(g_ref.dtype)


# ----------------------------------------------------------------------------
# Kernel 2: time-chunked recurrence (shared body for mid / last layers)
# ----------------------------------------------------------------------------
def _recurrent_chunk(gx_ref, len_ref, whh_ref, h_sc, c_sc, y_ref):
    """Runs one (Tc, Bc) time chunk of the LSTM recurrence.

    gx_ref:  (Tc, Bc, 4H) precomputed input-projection gates (f32)
    len_ref: (Bc, 1) int32 sequence lengths
    whh_ref: (H, 4H) hidden->gates weights (f32 or bf16 operands)
    h_sc/c_sc: (Bc, H) f32 VMEM scratch carrying the recurrence across chunks
    y_ref:   (Tc, Bc, H) per-step hidden output slab, or None for the last layer
    Returns the chunk-final hidden state (Bc, H) f32.
    """
    t_blk = pl.program_id(1)
    Tc = gx_ref.shape[0]
    H = h_sc.shape[-1]

    @pl.when(t_blk == 0)
    def _init():
        h_sc[...] = jnp.zeros_like(h_sc)
        c_sc[...] = jnp.zeros_like(c_sc)

    whh = whh_ref[...]                            # hoisted once per chunk
    lens = len_ref[...]                           # (Bc, 1) int32
    t0 = t_blk * Tc

    def step(i, carry):
        h, c = carry
        # Only the (Bc,H)@(H,4H) recurrent matmul remains on the serial path;
        # gate extraction stays within one 4H=128-lane vreg (PyTorch i,f,g,o order).
        gates = gx_ref[i] + jnp.dot(h.astype(whh.dtype), whh,
                                    preferred_element_type=jnp.float32)
        i_g = jax.nn.sigmoid(gates[:, 0 * H:1 * H])
        f_g = jax.nn.sigmoid(gates[:, 1 * H:2 * H])
        g_g = jnp.tanh(gates[:, 2 * H:3 * H])
        o_g = jax.nn.sigmoid(gates[:, 3 * H:4 * H])
        c_new = f_g * c + i_g * g_g
        h_new = o_g * jnp.tanh(c_new)
        # pack_padded_sequence semantics: freeze state once t >= length[b]
        valid = lens > (t0 + i)                   # (Bc, 1) bool
        h = jnp.where(valid, h_new, h)
        c = jnp.where(valid, c_new, c)
        if y_ref is not None:
            y_ref[i] = h.astype(y_ref.dtype)      # VMEM write; HBM flush once/chunk
        return h, c

    h, c = lax.fori_loop(0, Tc, step, (h_sc[...], c_sc[...]), unroll=True)
    h_sc[...] = h
    c_sc[...] = c
    return h


def lstm_mid_kernel(gx_ref, len_ref, whh_ref, y_ref, h_sc, c_sc):
    """Intermediate layer: emits the full per-timestep hidden slab only."""
    _recurrent_chunk(gx_ref, len_ref, whh_ref, h_sc, c_sc, y_ref=y_ref)


def lstm_last_kernel(gx_ref, len_ref, whh_ref, fcw_ref, fcb_ref, pred_ref,
                     h_sc, c_sc):
    """Last layer: no y / c_n outputs; FC head fused into the final chunk."""
    h = _recurrent_chunk(gx_ref, len_ref, whh_ref, h_sc, c_sc, y_ref=None)

    @pl.when(pl.program_id(1) == pl.num_programs(1) - 1)
    def _final():
        # nn.Dropout in eval mode is identity -> fc(h_n[-1]) directly.
        pred_ref[...] = (jnp.dot(h, fcw_ref[...],
                                 preferred_element_type=jnp.float32)
                         + fcb_ref[...]).astype(pred_ref.dtype)


# ----------------------------------------------------------------------------
# Wrappers
# ----------------------------------------------------------------------------
def _layer_gates_x(x_tm, wih_t, bias, *, t_chunk):
    """x_tm: (T_pad, B, D). Returns gates_x (T_pad, B, 4H) f32 via one big matmul."""
    Tp, B, D = x_tm.shape
    G = wih_t.shape[1]
    rows = Tp * B
    row_block = t_chunk * B
    if row_block % 8 != 0 or rows % row_block != 0:
        row_block = rows                           # single-block fallback (small inputs)
    x2d = x_tm.reshape(rows, D)
    gx2d = pl.pallas_call(
        input_proj_kernel,
        out_shape=jax.ShapeDtypeStruct((rows, G), jnp.float32),
        grid_spec=pltpu.PrefetchScalarGridSpec(
            num_scalar_prefetch=0,
            grid=(rows // row_block,),
            in_specs=[
                pl.BlockSpec((row_block, D), lambda r: (r, 0)),
                pl.BlockSpec((D, G), lambda r: (0, 0)),
                pl.BlockSpec((1, G), lambda r: (0, 0)),
            ],
            out_specs=pl.BlockSpec((row_block, G), lambda r: (r, 0)),
        ),
        compiler_params=pltpu.CompilerParams(dimension_semantics=("parallel",)),
    )(x2d, wih_t, bias)
    return gx2d.reshape(Tp, B, G)


def _run_recurrent(gx, len2d, whh_t, fc, *, t_chunk, b_chunk):
    """gx: (T_pad, B, 4H). fc=None -> returns y (T_pad,B,H); fc=(w,b) -> (B,1) pred."""
    Tp, B, G = gx.shape
    H = whh_t.shape[0]
    nt = Tp // t_chunk
    nb = B // b_chunk
    common_in = [
        pl.BlockSpec((t_chunk, b_chunk, G), lambda b, t: (t, b, 0)),
        pl.BlockSpec((b_chunk, 1), lambda b, t: (b, 0)),
        pl.BlockSpec((H, G), lambda b, t: (0, 0)),
        # TODO(synk): constant-index weight/length blocks could use
        # pipeline_mode=pl.Buffered(1) to avoid double-buffering at large H.
    ]
    scratch = [pltpu.VMEM((b_chunk, H), jnp.float32),
               pltpu.VMEM((b_chunk, H), jnp.float32)]
    cparams = pltpu.CompilerParams(
        dimension_semantics=("parallel", "arbitrary"))

    if fc is None:
        return pl.pallas_call(
            lstm_mid_kernel,
            out_shape=jax.ShapeDtypeStruct((Tp, B, H), jnp.float32),
            grid_spec=pltpu.PrefetchScalarGridSpec(
                num_scalar_prefetch=0, grid=(nb, nt),
                in_specs=common_in,
                out_specs=pl.BlockSpec((t_chunk, b_chunk, H),
                                       lambda b, t: (t, b, 0)),
                scratch_shapes=scratch),
            compiler_params=cparams,
        )(gx, len2d, whh_t)

    fcw_t, fcb = fc
    return pl.pallas_call(
        lstm_last_kernel,
        out_shape=jax.ShapeDtypeStruct((B, 1), jnp.float32),
        grid_spec=pltpu.PrefetchScalarGridSpec(
            num_scalar_prefetch=0, grid=(nb, nt),
            in_specs=common_in + [
                pl.BlockSpec((H, 1), lambda b, t: (0, 0)),
                pl.BlockSpec((1, 1), lambda b, t: (0, 0)),
            ],
            out_specs=pl.BlockSpec((b_chunk, 1), lambda b, t: (b, 0)),
            scratch_shapes=scratch),
        compiler_params=cparams,
    )(gx, len2d, whh_t, fcw_t, fcb)


@functools.partial(jax.jit, static_argnames=("t_chunk", "b_chunk", "matmul_dtype"))
def baseline_lstm_regressor_forward(x, lengths, params, *, t_chunk=16,
                                    b_chunk=None, matmul_dtype=jnp.float32):
    """Mirrors BaselineLSTMRegressor.forward (eval mode).

    x: (B, T, input_size) float32, lengths: (B,) int32.
    params: {'layers': [(w_ih, w_hh, b_ih, b_hh), ...], 'fc_w', 'fc_b'} (PyTorch layout).
    t_chunk: timesteps per grid step (recurrence runs unrolled inside the kernel).
    b_chunk: batch chunk for the "parallel" grid axis (must equal B or be a
             multiple of 8); default B. >1 batch chunks exploit v7x's 2 TCs.
    matmul_dtype: operand dtype for MXU matmuls (bf16 recommended on v6e/v7x);
             accumulation, activations and h/c state stay f32 (v5e-friendly).
    Returns (B, 1) float32 predictions.
    """
    x = x.astype(jnp.float32)
    B, T, _ = x.shape
    t_chunk = max(1, min(t_chunk, T))
    T_pad = ((T + t_chunk - 1) // t_chunk) * t_chunk
    if b_chunk is None:
        b_chunk = B
    assert B % b_chunk == 0 and (b_chunk == B or b_chunk % 8 == 0)

    x_tm = jnp.transpose(x, (1, 0, 2))                        # (T, B, D)
    if T_pad != T:
        # Padded steps are masked out by the length comparison inside the kernel.
        x_tm = jnp.pad(x_tm, ((0, T_pad - T), (0, 0), (0, 0)))
    len2d = lengths.astype(jnp.int32).reshape(B, 1)

    fcw_t = jnp.asarray(params["fc_w"], jnp.float32).T.reshape(-1, 1)   # (H, 1)
    fcb = jnp.asarray(params["fc_b"], jnp.float32).reshape(1, 1)

    n_layers = len(params["layers"])
    layer_in = x_tm
    pred = None
    for li, (w_ih, w_hh, b_ih, b_hh) in enumerate(params["layers"]):
        wih_t = jnp.asarray(w_ih, jnp.float32).T.astype(matmul_dtype)   # (D_l, 4H)
        whh_t = jnp.asarray(w_hh, jnp.float32).T.astype(matmul_dtype)   # (H, 4H)
        bias = (jnp.asarray(b_ih, jnp.float32)
                + jnp.asarray(b_hh, jnp.float32)).reshape(1, -1)        # (1, 4H)

        gx = _layer_gates_x(layer_in, wih_t, bias, t_chunk=t_chunk)
        if li == n_layers - 1:
            pred = _run_recurrent(gx, len2d, whh_t, fc=(fcw_t, fcb),
                                  t_chunk=t_chunk, b_chunk=b_chunk)
        else:
            layer_in = _run_recurrent(gx, len2d, whh_t, fc=None,
                                      t_chunk=t_chunk, b_chunk=b_chunk)
        # TODO(synk): inter-layer LSTM dropout (training-only) is identity in
        # eval mode and therefore omitted.
    return pred


# ----------------------------------------------------------------------------
# Deterministic parameter init (PyTorch default: U(-1/sqrt(H), 1/sqrt(H)))
# ----------------------------------------------------------------------------
def init_params(key, input_size, hidden_size, num_layers):
    k = 1.0 / np.sqrt(hidden_size)
    layers = []
    for layer in range(num_layers):
        in_dim = input_size if layer == 0 else hidden_size
        key, k1, k2, k3, k4 = jax.random.split(key, 5)
        layers.append((
            jax.random.uniform(k1, (4 * hidden_size, in_dim), jnp.float32, -k, k),
            jax.random.uniform(k2, (4 * hidden_size, hidden_size), jnp.float32, -k, k),
            jax.random.uniform(k3, (4 * hidden_size,), jnp.float32, -k, k),
            jax.random.uniform(k4, (4 * hidden_size,), jnp.float32, -k, k),
        ))
    key, k5, k6 = jax.random.split(key, 3)
    fc_w = jax.random.uniform(k5, (1, hidden_size), jnp.float32, -k, k)
    fc_b = jax.random.uniform(k6, (1,), jnp.float32, -k, k)
    return {"layers": layers, "fc_w": fc_w, "fc_b": fc_b}


# ----------------------------------------------------------------------------
# Pure-JAX reference (mirrors PyTorch packed-LSTM + Linear in eval mode)
# ----------------------------------------------------------------------------
def reference_forward(x, lengths, params):
    B, T, _ = x.shape
    H = params["layers"][0][1].shape[1]
    layer_in = jnp.transpose(x, (1, 0, 2))                    # (T, B, D)
    h = None
    for (w_ih, w_hh, b_ih, b_hh) in params["layers"]:
        def step(carry, inp, w_ih=w_ih, w_hh=w_hh, b_ih=b_ih, b_hh=b_hh):
            h, c = carry
            x_t, t = inp
            gates = x_t @ w_ih.T + h @ w_hh.T + b_ih + b_hh
            i = jax.nn.sigmoid(gates[:, :H])
            f = jax.nn.sigmoid(gates[:, H:2 * H])
            g = jnp.tanh(gates[:, 2 * H:3 * H])
            o = jax.nn.sigmoid(gates[:, 3 * H:])
            c_new = f * c + i * g
            h_new = o * jnp.tanh(c_new)
            valid = (t < lengths)[:, None]
            h = jnp.where(valid, h_new, h)
            c = jnp.where(valid, c_new, c)
            return (h, c), h
        init = (jnp.zeros((B, H), jnp.float32), jnp.zeros((B, H), jnp.float32))
        (h, _c), ys = lax.scan(step, init, (layer_in, jnp.arange(T)))
        layer_in = ys
    return h @ params["fc_w"].T + params["fc_b"]


if __name__ == "__main__":
    batch, seq_len, input_size, hidden_size, num_layers = 4, 8, 16, 32, 2
    dropout_prob = 0.2  # inactive in eval mode

    root = jax.random.PRNGKey(0)
    kx, kp = jax.random.split(root, 2)
    x = jax.random.normal(kx, (batch, seq_len, input_size), jnp.float32)
    lengths = jnp.array([8, 5, 3, 7], dtype=jnp.int32)  # variable-length sequences
    params = init_params(kp, input_size, hidden_size, num_layers)

    # f32 path (exact vs reference)
    pred = baseline_lstm_regressor_forward(x, lengths, params)
    pred = jax.block_until_ready(pred)
    assert pred.shape == (batch, 1)

    ref = reference_forward(x, lengths, params)
    np.testing.assert_allclose(np.asarray(pred), np.asarray(ref),
                               rtol=2e-5, atol=2e-5)

    # bf16 MXU-operand path (v6e/v7x recommendation): f32 accumulation & state.
    pred_bf16 = baseline_lstm_regressor_forward(
        x, lengths, params, matmul_dtype=jnp.bfloat16)
    pred_bf16 = jax.block_until_ready(pred_bf16)
    np.testing.assert_allclose(np.asarray(pred_bf16), np.asarray(ref),
                               rtol=5e-2, atol=5e-2)

    print("KERNEL_OK")
</pallas_src>

<mosaic_0001>
module attributes {stable_mosaic.version = 11 : i64} {
  func.func @input_proj_kernel(%arg0: i32, %arg1: memref<32x16xf32, #tpu.memory_space<vmem>>, %arg2: memref<16x128xf32, #tpu.memory_space<vmem>>, %arg3: memref<1x128xf32, #tpu.memory_space<vmem>>, %arg4: memref<32x128xf32, #tpu.memory_space<vmem>>) attributes {dimension_semantics = [#tpu.dimension_semantics<parallel>], iteration_bounds = array<i64: 1>, scalar_prefetch = 0 : i64, scratch_operands = 0 : i64, tpu.core_type = #tpu.core_type<tc>, window_params = [{transform_indices = @transform_0, window_bounds = array<i64: 32, 16>}, {pipeline_mode = #tpu.pipeline_mode<synchronous>, transform_indices = @transform_1, window_bounds = array<i64: 16, 128>}, {pipeline_mode = #tpu.pipeline_mode<synchronous>, transform_indices = @transform_2, window_bounds = array<i64: 1, 128>}, {transform_indices = @transform_3, window_bounds = array<i64: 32, 128>}]} {
    %c0 = arith.constant 0 : index
    %c0_0 = arith.constant 0 : index
    %0 = vector.load %arg1[%c0, %c0_0] : memref<32x16xf32, #tpu.memory_space<vmem>>, vector<32x16xf32>
    %c0_1 = arith.constant 0 : index
    %c0_2 = arith.constant 0 : index
    %1 = vector.load %arg2[%c0_1, %c0_2] : memref<16x128xf32, #tpu.memory_space<vmem>>, vector<16x128xf32>
    %cst = arith.constant dense<0.000000e+00> : vector<32x128xf32>
    %2 = tpu.matmul %0, %1, %cst {dimension_numbers = #tpu.dot_dimension_numbers<[1], [0], [0], [1], [0, 0, 1, 1], [], []>} : vector<32x16xf32>, vector<16x128xf32>, vector<32x128xf32> -> vector<32x128xf32>
    %c0_3 = arith.constant 0 : index
    %c0_4 = arith.constant 0 : index
    %3 = vector.load %arg3[%c0_3, %c0_4] : memref<1x128xf32, #tpu.memory_space<vmem>>, vector<1x128xf32>
    %4 = vector.broadcast %3 : vector<1x128xf32> to vector<32x128xf32>
    %5 = arith.addf %2, %4 : vector<32x128xf32>
    %c0_5 = arith.constant 0 : index
    %c0_6 = arith.constant 0 : index
    %6 = vector.load %arg4[%c0_5, %c0_6] : memref<32x128xf32, #tpu.memory_space<vmem>>, vector<32x128xf32>
    tpu.vector_store %arg4[%c0_5, %c0_6], %5 {strides = array<i32>} : memref<32x128xf32, #tpu.memory_space<vmem>>, vector<32x128xf32>,
    return
  }
  func.func @transform_0(%arg0: i32) -> (i32, i32) {
    %c0_i32 = arith.constant 0 : i32
    %c0_i32_0 = arith.constant 0 : i32
    return %arg0, %c0_i32 : i32, i32
  }
  func.func @transform_1(%arg0: i32) -> (i32, i32) {
    %c0_i32 = arith.constant 0 : i32
    %c0_i32_0 = arith.constant 0 : i32
    %c0_i32_1 = arith.constant 0 : i32
    return %c0_i32, %c0_i32_0 : i32, i32
  }
  func.func @transform_2(%arg0: i32) -> (i32, i32) {
    %c0_i32 = arith.constant 0 : i32
    %c0_i32_0 = arith.constant 0 : i32
    %c0_i32_1 = arith.constant 0 : i32
    return %c0_i32, %c0_i32_0 : i32, i32
  }
  func.func @transform_3(%arg0: i32) -> (i32, i32) {
    %c0_i32 = arith.constant 0 : i32
    %c0_i32_0 = arith.constant 0 : i32
    return %arg0, %c0_i32 : i32, i32
  }
}

module attributes {stable_mosaic.version = 11 : i64} {
  func.func @input_proj_kernel(%arg0: i32, %arg1: memref<32x32xf32, #tpu.memory_space<vmem>>, %arg2: memref<32x128xf32, #tpu.memory_space<vmem>>, %arg3: memref<1x128xf32, #tpu.memory_space<vmem>>, %arg4: memref<32x128xf32, #tpu.memory_space<vmem>>) attributes {dimension_semantics = [#tpu.dimension_semantics<parallel>], iteration_bounds = array<i64: 1>, scalar_prefetch = 0 : i64, scratch_operands = 0 : i64, tpu.core_type = #tpu.core_type<tc>, window_params = [{transform_indices = @transform_0, window_bounds = array<i64: 32, 32>}, {pipeline_mode = #tpu.pipeline_mode<synchronous>, transform_indices = @transform_1, window_bounds = array<i64: 32, 128>}, {pipeline_mode = #tpu.pipeline_mode<synchronous>, transform_indices = @transform_2, window_bounds = array<i64: 1, 128>}, {transform_indices = @transform_3, window_bounds = array<i64: 32, 128>}]} {
    %c0 = arith.constant 0 : index
    %c0_0 = arith.constant 0 : index
    %0 = vector.load %arg1[%c0, %c0_0] : memref<32x32xf32, #tpu.memory_space<vmem>>, vector<32x32xf32>
    %c0_1 = arith.constant 0 : index
    %c0_2 = arith.constant 0 : index
    %1 = vector.load %arg2[%c0_1, %c0_2] : memref<32x128xf32, #tpu.memory_space<vmem>>, vector<32x128xf32>
    %cst = arith.constant dense<0.000000e+00> : vector<32x128xf32>
    %2 = tpu.matmul %0, %1, %cst {dimension_numbers = #tpu.dot_dimension_numbers<[1], [0], [0], [1], [0, 0, 1, 1], [], []>} : vector<32x32xf32>, vector<32x128xf32>, vector<32x128xf32> -> vector<32x128xf32>
    %c0_3 = arith.constant 0 : index
    %c0_4 = arith.constant 0 : index
    %3 = vector.load %arg3[%c0_3, %c0_4] : memref<1x128xf32, #tpu.memory_space<vmem>>, vector<1x128xf32>
    %4 = vector.broadcast %3 : vector<1x128xf32> to vector<32x128xf32>
    %5 = arith.addf %2, %4 : vector<32x128xf32>
    %c0_5 = arith.constant 0 : index
    %c0_6 = arith.constant 0 : index
    %6 = vector.load %arg4[%c0_5, %c0_6] : memref<32x128xf32, #tpu.memory_space<vmem>>, vector<32x128xf32>
    tpu.vector_store %arg4[%c0_5, %c0_6], %5 {strides = array<i32>} : memref<32x128xf32, #tpu.memory_space<vmem>>, vector<32x128xf32>,
    return
  }
  func.func @transform_0(%arg0: i32) -> (i32, i32) {
    %c0_i32 = arith.constant 0 : i32
    %c0_i32_0 = arith.constant 0 : i32
    return %arg0, %c0_i32 : i32, i32
  }
  func.func @transform_1(%arg0: i32) -> (i32, i32) {
    %c0_i32 = arith.constant 0 : i32
    %c0_i32_0 = arith.constant 0 : i32
    %c0_i32_1 = arith.constant 0 : i32
    return %c0_i32, %c0_i32_0 : i32, i32
  }
  func.func @transform_2(%arg0: i32) -> (i32, i32) {
    %c0_i32 = arith.constant 0 : i32
    %c0_i32_0 = arith.constant 0 : i32
    %c0_i32_1 = arith.constant 0 : i32
    return %c0_i32, %c0_i32_0 : i32, i32
  }
  func.func @transform_3(%arg0: i32) -> (i32, i32) {
    %c0_i32 = arith.constant 0 : i32
    %c0_i32_0 = arith.constant 0 : i32
    return %arg0, %c0_i32 : i32, i32
  }
}

module attributes {stable_mosaic.version = 11 : i64} {
  func.func @lstm_mid_kernel(%arg0: i32, %arg1: i32, %arg2: memref<8x4x128xf32, #tpu.memory_space<vmem>>, %arg3: memref<4x1xi32, #tpu.memory_space<vmem>>, %arg4: memref<32x128xf32, #tpu.memory_space<vmem>>, %arg5: memref<8x4x32xf32, #tpu.memory_space<vmem>>, %arg6: memref<4x32xf32, #tpu.memory_space<vmem>>, %arg7: memref<4x32xf32, #tpu.memory_space<vmem>>) attributes {dimension_semantics = [#tpu.dimension_semantics<parallel>, #tpu.dimension_semantics<arbitrary>], iteration_bounds = array<i64: 1, 1>, scalar_prefetch = 0 : i64, scratch_operands = 2 : i64, tpu.core_type = #tpu.core_type<tc>, window_params = [{transform_indices = @transform_0, window_bounds = array<i64: 8, 4, 128>}, {transform_indices = @transform_1, window_bounds = array<i64: 4, 1>}, {pipeline_mode = #tpu.pipeline_mode<synchronous>, transform_indices = @transform_2, window_bounds = array<i64: 32, 128>}, {transform_indices = @transform_3, window_bounds = array<i64: 8, 4, 32>}]} {
    %c0_i32 = arith.constant 0 : i32
    %0 = arith.cmpi eq, %arg1, %c0_i32 : i32
    %1 = arith.extui %0 : i1 to i32
    %c0_i32_0 = arith.constant 0 : i32
    %2 = arith.cmpi ne, %1, %c0_i32_0 : i32
    scf.if %2 {
      %cst_77 = arith.constant 0.000000e+00 : f32
      %354 = vector.broadcast %cst_77 : f32 to vector<4x32xf32>
      %c0_78 = arith.constant 0 : index
      %c0_79 = arith.constant 0 : index
      %355 = vector.load %arg6[%c0_78, %c0_79] : memref<4x32xf32, #tpu.memory_space<vmem>>, vector<4x32xf32>
      tpu.vector_store %arg6[%c0_78, %c0_79], %354 {strides = array<i32>} : memref<4x32xf32, #tpu.memory_space<vmem>>, vector<4x32xf32>,
      %cst_80 = arith.constant 0.000000e+00 : f32
      %356 = vector.broadcast %cst_80 : f32 to vector<4x32xf32>
      %c0_81 = arith.constant 0 : index
      %c0_82 = arith.constant 0 : index
      %357 = vector.load %arg7[%c0_81, %c0_82] : memref<4x32xf32, #tpu.memory_space<vmem>>, vector<4x32xf32>
      tpu.vector_store %arg7[%c0_81, %c0_82], %356 {strides = array<i32>} : memref<4x32xf32, #tpu.memory_space<vmem>>, vector<4x32xf32>,
    } else {
    }
    %c0 = arith.constant 0 : index
    %c0_1 = arith.constant 0 : index
    %3 = vector.load %arg4[%c0, %c0_1] : memref<32x128xf32, #tpu.memory_space<vmem>>, vector<32x128xf32>
    %c0_2 = arith.constant 0 : index
    %c0_3 = arith.constant 0 : index
    %4 = vector.load %arg3[%c0_2, %c0_3] : memref<4x1xi32, #tpu.memory_space<vmem>>, vector<4x1xi32>
    %c8_i32 = arith.constant 8 : i32
    %5 = arith.muli %arg1, %c8_i32 : i32
    %c0_4 = arith.constant 0 : index
    %c0_5 = arith.constant 0 : index
    %6 = vector.load %arg6[%c0_4, %c0_5] : memref<4x32xf32, #tpu.memory_space<vmem>>, vector<4x32xf32>
    %c0_6 = arith.constant 0 : index
    %c0_7 = arith.constant 0 : index
    %7 = vector.load %arg7[%c0_6, %c0_7] : memref<4x32xf32, #tpu.memory_space<vmem>>, vector<4x32xf32>
    %c0_i32_8 = arith.constant 0 : i32
    %8 = arith.index_cast %c0_i32_8 : i32 to index
    %c0_9 = arith.constant 0 : index
    %c0_10 = arith.constant 0 : index
    %9 = vector.load %arg2[%8, %c0_9, %c0_10] : memref<8x4x128xf32, #tpu.memory_space<vmem>>, vector<1x4x128xf32>
    %10 = vector.shape_cast %9 : vector<1x4x128xf32> to vector<4x128xf32>
    %cst = arith.constant dense<0.000000e+00> : vector<4x128xf32>
    %11 = tpu.matmul %6, %3, %cst {dimension_numbers = #tpu.dot_dimension_numbers<[1], [0], [0], [1], [0, 0, 1, 1], [], []>} : vector<4x32xf32>, vector<32x128xf32>, vector<4x128xf32> -> vector<4x128xf32>
    %12 = arith.addf %10, %11 : vector<4x128xf32>
    %13 = vector.extract_strided_slice %12 {offsets = [0, 0], sizes = [4, 32], strides = [1, 1]} : vector<4x128xf32> to vector<4x32xf32>
    %14 = arith.negf %13 : vector<4x32xf32>
    %15 = math.exp %14 : vector<4x32xf32>
    %cst_11 = arith.constant 1.000000e+00 : f32
    %16 = vector.broadcast %cst_11 : f32 to vector<4x32xf32>
    %17 = arith.addf %16, %15 : vector<4x32xf32>
    %18 = arith.divf %16, %17 : vector<4x32xf32>
    %19 = vector.extract_strided_slice %12 {offsets = [0, 32], sizes = [4, 32], strides = [1, 1]} : vector<4x128xf32> to vector<4x32xf32>
    %20 = arith.negf %19 : vector<4x32xf32>
    %21 = math.exp %20 : vector<4x32xf32>
    %cst_12 = arith.constant 1.000000e+00 : f32
    %22 = vector.broadcast %cst_12 : f32 to vector<4x32xf32>
    %23 = arith.addf %22, %21 : vector<4x32xf32>
    %24 = arith.divf %22, %23 : vector<4x32xf32>
    %25 = vector.extract_strided_slice %12 {offsets = [0, 64], sizes = [4, 32], strides = [1, 1]} : vector<4x128xf32> to vector<4x32xf32>
    %26 = math.tanh %25 : vector<4x32xf32>
    %27 = vector.extract_strided_slice %12 {offsets = [0, 96], sizes = [4, 32], strides = [1, 1]} : vector<4x128xf32> to vector<4x32xf32>
    %28 = arith.negf %27 : vector<4x32xf32>
    %29 = math.exp %28 : vector<4x32xf32>
    %cst_13 = arith.constant 1.000000e+00 : f32
    %30 = vector.broadcast %cst_13 : f32 to vector<4x32xf32>
    %31 = arith.addf %30, %29 : vector<4x32xf32>
    %32 = arith.divf %30, %31 : vector<4x32xf32>
    %33 = arith.mulf %24, %7 : vector<4x32xf32>
    %34 = arith.mulf %18, %26 : vector<4x32xf32>
    %35 = arith.addf %33, %34 : vector<4x32xf32>
    %36 = math.tanh %35 : vector<4x32xf32>
    %37 = arith.mulf %32, %36 : vector<4x32xf32>
    %38 = arith.addi %5, %c0_i32_8 : i32
    %39 = vector.broadcast %38 : i32 to vector<4x1xi32>
    %40 = arith.cmpi sgt, %4, %39 : vector<4x1xi32>
    %41 = vector.shape_cast %40 : vector<4x1xi1> to vector<4x1xi1>
    %42 = vector.broadcast %41 : vector<4x1xi1> to vector<4x32xi1>
    %43 = arith.select %42, %37, %6 : vector<4x32xi1>, vector<4x32xf32>
    %44 = vector.shape_cast %40 : vector<4x1xi1> to vector<4x1xi1>
    %45 = vector.broadcast %44 : vector<4x1xi1> to vector<4x32xi1>
    %46 = arith.select %45, %35, %7 : vector<4x32xi1>, vector<4x32xf32>
    %47 = arith.index_cast %c0_i32_8 : i32 to index
    %c0_14 = arith.constant 0 : index
    %c0_15 = arith.constant 0 : index
    %48 = vector.load %arg5[%47, %c0_14, %c0_15] : memref<8x4x32xf32, #tpu.memory_space<vmem>>, vector<1x4x32xf32>
    %49 = vector.shape_cast %48 : vector<1x4x32xf32> to vector<4x32xf32>
    %50 = vector.shape_cast %43 : vector<4x32xf32> to vector<1x4x32xf32>
    tpu.vector_store %arg5[%47, %c0_14, %c0_15], %50 {strides = array<i32>} : memref<8x4x32xf32, #tpu.memory_space<vmem>>, vector<1x4x32xf32>,
    %c1_i32 = arith.constant 1 : i32
    %51 = arith.index_cast %c1_i32 : i32 to index
    %c0_16 = arith.constant 0 : index
    %c0_17 = arith.constant 0 : index
    %52 = vector.load %arg2[%51, %c0_16, %c0_17] : memref<8x4x128xf32, #tpu.memory_space<vmem>>, vector<1x4x128xf32>
    %53 = vector.shape_cast %52 : vector<1x4x128xf32> to vector<4x128xf32>
    %cst_18 = arith.constant dense<0.000000e+00> : vector<4x128xf32>
    %54 = tpu.matmul %43, %3, %cst_18 {dimension_numbers = #tpu.dot_dimension_numbers<[1], [0], [0], [1], [0, 0, 1, 1], [], []>} : vector<4x32xf32>, vector<32x128xf32>, vector<4x128xf32> -> vector<4x128xf32>
    %55 = arith.addf %53, %54 : vector<4x128xf32>
    %56 = vector.extract_strided_slice %55 {offsets = [0, 0], sizes = [4, 32], strides = [1, 1]} : vector<4x128xf32> to vector<4x32xf32>
    %57 = arith.negf %56 : vector<4x32xf32>
    %58 = math.exp %57 : vector<4x32xf32>
    %cst_19 = arith.constant 1.000000e+00 : f32
    %59 = vector.broadcast %cst_19 : f32 to vector<4x32xf32>
    %60 = arith.addf %59, %58 : vector<4x32xf32>
    %61 = arith.divf %59, %60 : vector<4x32xf32>
    %62 = vector.extract_strided_slice %55 {offsets = [0, 32], sizes = [4, 32], strides = [1, 1]} : vector<4x128xf32> to vector<4x32xf32>
    %63 = arith.negf %62 : vector<4x32xf32>
    %64 = math.exp %63 : vector<4x32xf32>
    %cst_20 = arith.constant 1.000000e+00 : f32
    %65 = vector.broadcast %cst_20 : f32 to vector<4x32xf32>
    %66 = arith.addf %65, %64 : vector<4x32xf32>
    %67 = arith.divf %65, %66 : vector<4x32xf32>
    %68 = vector.extract_strided_slice %55 {offsets = [0, 64], sizes = [4, 32], strides = [1, 1]} : vector<4x128xf32> to vector<4x32xf32>
    %69 = math.tanh %68 : vector<4x32xf32>
    %70 = vector.extract_strided_slice %55 {offsets = [0, 96], sizes = [4, 32], strides = [1, 1]} : vector<4x128xf32> to vector<4x32xf32>
    %71 = arith.negf %70 : vector<4x32xf32>
    %72 = math.exp %71 : vector<4x32xf32>
    %cst_21 = arith.constant 1.000000e+00 : f32
    %73 = vector.broadcast %cst_21 : f32 to vector<4x32xf32>
    %74 = arith.addf %73, %72 : vector<4x32xf32>
    %75 = arith.divf %73, %74 : vector<4x32xf32>
    %76 = arith.mulf %67, %46 : vector<4x32xf32>
    %77 = arith.mulf %61, %69 : vector<4x32xf32>
    %78 = arith.addf %76, %77 : vector<4x32xf32>
    %79 = math.tanh %78 : vector<4x32xf32>
    %80 = arith.mulf %75, %79 : vector<4x32xf32>
    %81 = arith.addi %5, %c1_i32 : i32
    %82 = vector.broadcast %81 : i32 to vector<4x1xi32>
    %83 = arith.cmpi sgt, %4, %82 : vector<4x1xi32>
    %84 = vector.shape_cast %83 : vector<4x1xi1> to vector<4x1xi1>
    %85 = vector.broadcast %84 : vector<4x1xi1> to vector<4x32xi1>
    %86 = arith.select %85, %80, %43 : vector<4x32xi1>, vector<4x32xf32>
    %87 = vector.shape_cast %83 : vector<4x1xi1> to vector<4x1xi1>
    %88 = vector.broadcast %87 : vector<4x1xi1> to vector<4x32xi1>
    %89 = arith.select %88, %78, %46 : vector<4x32xi1>, vector<4x32xf32>
    %90 = arith.index_cast %c1_i32 : i32 to index
    %c0_22 = arith.constant 0 : index
    %c0_23 = arith.constant 0 : index
    %91 = vector.load %arg5[%90, %c0_22, %c0_23] : memref<8x4x32xf32, #tpu.memory_space<vmem>>, vector<1x4x32xf32>
    %92 = vector.shape_cast %91 : vector<1x4x32xf32> to vector<4x32xf32>
    %93 = vector.shape_cast %86 : vector<4x32xf32> to vector<1x4x32xf32>
    tpu.vector_store %arg5[%90, %c0_22, %c0_23], %93 {strides = array<i32>} : memref<8x4x32xf32, #tpu.memory_space<vmem>>, vector<1x4x32xf32>,
    %c2_i32 = arith.constant 2 : i32
    %94 = arith.index_cast %c2_i32 : i32 to index
    %c0_24 = arith.constant 0 : index
    %c0_25 = arith.constant 0 : index
    %95 = vector.load %arg2[%94, %c0_24, %c0_25] : memref<8x4x128xf32, #tpu.memory_space<vmem>>, vector<1x4x128xf32>
    %96 = vector.shape_cast %95 : vector<1x4x128xf32> to vector<4x128xf32>
    %cst_26 = arith.constant dense<0.000000e+00> : vector<4x128xf32>
    %97 = tpu.matmul %86, %3, %cst_26 {dimension_numbers = #tpu.dot_dimension_numbers<[1], [0], [0], [1], [0, 0, 1, 1], [], []>} : vector<4x32xf32>, vector<32x128xf32>, vector<4x128xf32> -> vector<4x128xf32>
    %98 = arith.addf %96, %97 : vector<4x128xf32>
    %99 = vector.extract_strided_slice %98 {offsets = [0, 0], sizes = [4, 32], strides = [1, 1]} : vector<4x128xf32> to vector<4x32xf32>
    %100 = arith.negf %99 : vector<4x32xf32>
    %101 = math.exp %100 : vector<4x32xf32>
    %cst_27 = arith.constant 1.000000e+00 : f32
    %102 = vector.broadcast %cst_27 : f32 to vector<4x32xf32>
    %103 = arith.addf %102, %101 : vector<4x32xf32>
    %104 = arith.divf %102, %103 : vector<4x32xf32>
    %105 = vector.extract_strided_slice %98 {offsets = [0, 32], sizes = [4, 32], strides = [1, 1]} : vector<4x128xf32> to vector<4x32xf32>
    %106 = arith.negf %105 : vector<4x32xf32>
    %107 = math.exp %106 : vector<4x32xf32>
    %cst_28 = arith.constant 1.000000e+00 : f32
    %108 = vector.broadcast %cst_28 : f32 to vector<4x32xf32>
    %109 = arith.addf %108, %107 : vector<4x32xf32>
    %110 = arith.divf %108, %109 : vector<4x32xf32>
    %111 = vector.extract_strided_slice %98 {offsets = [0, 64], sizes = [4, 32], strides = [1, 1]} : vector<4x128xf32> to vector<4x32xf32>
    %112 = math.tanh %111 : vector<4x32xf32>
    %113 = vector.extract_strided_slice %98 {offsets = [0, 96], sizes = [4, 32], strides = [1, 1]} : vector<4x128xf32> to vector<4x32xf32>
    %114 = arith.negf %113 : vector<4x32xf32>
    %115 = math.exp %114 : vector<4x32xf32>
    %cst_29 = arith.constant 1.000000e+00 : f32
    %116 = vector.broadcast %cst_29 : f32 to vector<4x32xf32>
    %117 = arith.addf %116, %115 : vector<4x32xf32>
    %118 = arith.divf %116, %117 : vector<4x32xf32>
    %119 = arith.mulf %110, %89 : vector<4x32xf32>
    %120 = arith.mulf %104, %112 : vector<4x32xf32>
    %121 = arith.addf %119, %120 : vector<4x32xf32>
    %122 = math.tanh %121 : vector<4x32xf32>
    %123 = arith.mulf %118, %122 : vector<4x32xf32>
    %124 = arith.addi %5, %c2_i32 : i32
    %125 = vector.broadcast %124 : i32 to vector<4x1xi32>
    %126 = arith.cmpi sgt, %4, %125 : vector<4x1xi32>
    %127 = vector.shape_cast %126 : vector<4x1xi1> to vector<4x1xi1>
    %128 = vector.broadcast %127 : vector<4x1xi1> to vector<4x32xi1>
    %129 = arith.select %128, %123, %86 : vector<4x32xi1>, vector<4x32xf32>
    %130 = vector.shape_cast %126 : vector<4x1xi1> to vector<4x1xi1>
    %131 = vector.broadcast %130 : vector<4x1xi1> to vector<4x32xi1>
    %132 = arith.select %131, %121, %89 : vector<4x32xi1>, vector<4x32xf32>
    %133 = arith.index_cast %c2_i32 : i32 to index
    %c0_30 = arith.constant 0 : index
    %c0_31 = arith.constant 0 : index
    %134 = vector.load %arg5[%133, %c0_30, %c0_31] : memref<8x4x32xf32, #tpu.memory_space<vmem>>, vector<1x4x32xf32>
    %135 = vector.shape_cast %134 : vector<1x4x32xf32> to vector<4x32xf32>
    %136 = vector.shape_cast %129 : vector<4x32xf32> to vector<1x4x32xf32>
    tpu.vector_store %arg5[%133, %c0_30, %c0_31], %136 {strides = array<i32>} : memref<8x4x32xf32, #tpu.memory_space<vmem>>, vector<1x4x32xf32>,
    %c3_i32 = arith.constant 3 : i32
    %137 = arith.index_cast %c3_i32 : i32 to index
    %c0_32 = arith.constant 0 : index
    %c0_33 = arith.constant 0 : index
    %138 = vector.load %arg2[%137, %c0_32, %c0_33] : memref<8x4x128xf32, #tpu.memory_space<vmem>>, vector<1x4x128xf32>
    %139 = vector.shape_cast %138 : vector<1x4x128xf32> to vector<4x128xf32>
    %cst_34 = arith.constant dense<0.000000e+00> : vector<4x128xf32>
    %140 = tpu.matmul %129, %3, %cst_34 {dimension_numbers = #tpu.dot_dimension_numbers<[1], [0], [0], [1], [0, 0, 1, 1], [], []>} : vector<4x32xf32>, vector<32x128xf32>, vector<4x128xf32> -> vector<4x128xf32>
    %141 = arith.addf %139, %140 : vector<4x128xf32>
    %142 = vector.extract_strided_slice %141 {offsets = [0, 0], sizes = [4, 32], strides = [1, 1]} : vector<4x128xf32> to vector<4x32xf32>
    %143 = arith.negf %142 : vector<4x32xf32>
    %144 = math.exp %143 : vector<4x32xf32>
    %cst_35 = arith.constant 1.000000e+00 : f32
    %145 = vector.broadcast %cst_35 : f32 to vector<4x32xf32>
    %146 = arith.addf %145, %144 : vector<4x32xf32>
    %147 = arith.divf %145, %146 : vector<4x32xf32>
    %148 = vector.extract_strided_slice %141 {offsets = [0, 32], sizes = [4, 32], strides = [1, 1]} : vector<4x128xf32> to vector<4x32xf32>
    %149 = arith.negf %148 : vector<4x32xf32>
    %150 = math.exp %149 : vector<4x32xf32>
    %cst_36 = arith.constant 1.000000e+00 : f32
    %151 = vector.broadcast %cst_36 : f32 to vector<4x32xf32>
    %152 = arith.addf %151, %150 : vector<4x32xf32>
    %153 = arith.divf %151, %152 : vector<4x32xf32>
    %154 = vector.extract_strided_slice %141 {offsets = [0, 64], sizes = [4, 32], strides = [1, 1]} : vector<4x128xf32> to vector<4x32xf32>
    %155 = math.tanh %154 : vector<4x32xf32>
    %156 = vector.extract_strided_slice %141 {offsets = [0, 96], sizes = [4, 32], strides = [1, 1]} : vector<4x128xf32> to vector<4x32xf32>
    %157 = arith.negf %156 : vector<4x32xf32>
    %158 = math.exp %157 : vector<4x32xf32>
    %cst_37 = arith.constant 1.000000e+00 : f32
    %159 = vector.broadcast %cst_37 : f32 to vector<4x32xf32>
    %160 = arith.addf %159, %158 : vector<4x32xf32>
    %161 = arith.divf %159, %160 : vector<4x32xf32>
    %162 = arith.mulf %153, %132 : vector<4x32xf32>
    %163 = arith.mulf %147, %155 : vector<4x32xf32>
    %164 = arith.addf %162, %163 : vector<4x32xf32>
    %165 = math.tanh %164 : vector<4x32xf32>
    %166 = arith.mulf %161, %165 : vector<4x32xf32>
    %167 = arith.addi %5, %c3_i32 : i32
    %168 = vector.broadcast %167 : i32 to vector<4x1xi32>
    %169 = arith.cmpi sgt, %4, %168 : vector<4x1xi32>
    %170 = vector.shape_cast %169 : vector<4x1xi1> to vector<4x1xi1>
    %171 = vector.broadcast %170 : vector<4x1xi1> to vector<4x32xi1>
    %172 = arith.select %171, %166, %129 : vector<4x32xi1>, vector<4x32xf32>
    %173 = vector.shape_cast %169 : vector<4x1xi1> to vector<4x1xi1>
    %174 = vector.broadcast %173 : vector<4x1xi1> to vector<4x32xi1>
    %175 = arith.select %174, %164, %132 : vector<4x32xi1>, vector<4x32xf32>
    %176 = arith.index_cast %c3_i32 : i32 to index
    %c0_38 = arith.constant 0 : index
    %c0_39 = arith.constant 0 : index
    %177 = vector.load %arg5[%176, %c0_38, %c0_39] : memref<8x4x32xf32, #tpu.memory_space<vmem>>, vector<1x4x32xf32>
    %178 = vector.shape_cast %177 : vector<1x4x32xf32> to vector<4x32xf32>
    %179 = vector.shape_cast %172 : vector<4x32xf32> to vector<1x4x32xf32>
    tpu.vector_store %arg5[%176, %c0_38, %c0_39], %179 {strides = array<i32>} : memref<8x4x32xf32, #tpu.memory_space<vmem>>, vector<1x4x32xf32>,
    %c4_i32 = arith.constant 4 : i32
    %180 = arith.index_cast %c4_i32 : i32 to index
    %c0_40 = arith.constant 0 : index
    %c0_41 = arith.constant 0 : index
    %181 = vector.load %arg2[%180, %c0_40, %c0_41] : memref<8x4x128xf32, #tpu.memory_space<vmem>>, vector<1x4x128xf32>
    %182 = vector.shape_cast %181 : vector<1x4x128xf32> to vector<4x128xf32>
    %cst_42 = arith.constant dense<0.000000e+00> : vector<4x128xf32>
    %183 = tpu.matmul %172, %3, %cst_42 {dimension_numbers = #tpu.dot_dimension_numbers<[1], [0], [0], [1], [0, 0, 1, 1], [], []>} : vector<4x32xf32>, vector<32x128xf32>, vector<4x128xf32> -> vector<4x128xf32>
    %184 = arith.addf %182, %183 : vector<4x128xf32>
    %185 = vector.extract_strided_slice %184 {offsets = [0, 0], sizes = [4, 32], strides = [1, 1]} : vector<4x128xf32> to vector<4x32xf32>
    %186 = arith.negf %185 : vector<4x32xf32>
    %187 = math.exp %186 : vector<4x32xf32>
    %cst_43 = arith.constant 1.000000e+00 : f32
    %188 = vector.broadcast %cst_43 : f32 to vector<4x32xf32>
    %189 = arith.addf %188, %187 : vector<4x32xf32>
    %190 = arith.divf %188, %189 : vector<4x32xf32>
    %191 = vector.extract_strided_slice %184 {offsets = [0, 32], sizes = [4, 32], strides = [1, 1]} : vector<4x128xf32> to vector<4x32xf32>
    %192 = arith.negf %191 : vector<4x32xf32>
    %193 = math.exp %192 : vector<4x32xf32>
    %cst_44 = arith.constant 1.000000e+00 : f32
    %194 = vector.broadcast %cst_44 : f32 to vector<4x32xf32>
    %195 = arith.addf %194, %193 : vector<4x32xf32>
    %196 = arith.divf %194, %195 : vector<4x32xf32>
    %197 = vector.extract_strided_slice %184 {offsets = [0, 64], sizes = [4, 32], strides = [1, 1]} : vector<4x128xf32> to vector<4x32xf32>
    %198 = math.tanh %197 : vector<4x32xf32>
    %199 = vector.extract_strided_slice %184 {offsets = [0, 96], sizes = [4, 32], strides = [1, 1]} : vector<4x128xf32> to vector<4x32xf32>
    %200 = arith.negf %199 : vector<4x32xf32>
    %201 = math.exp %200 : vector<4x32xf32>
    %cst_45 = arith.constant 1.000000e+00 : f32
    %202 = vector.broadcast %cst_45 : f32 to vector<4x32xf32>
    %203 = arith.addf %202, %201 : vector<4x32xf32>
    %204 = arith.divf %202, %203 : vector<4x32xf32>
    %205 = arith.mulf %196, %175 : vector<4x32xf32>
    %206 = arith.mulf %190, %198 : vector<4x32xf32>
    %207 = arith.addf %205, %206 : vector<4x32xf32>
    %208 = math.tanh %207 : vector<4x32xf32>
    %209 = arith.mulf %204, %208 : vector<4x32xf32>
    %210 = arith.addi %5, %c4_i32 : i32
    %211 = vector.broadcast %210 : i32 to vector<4x1xi32>
    %212 = arith.cmpi sgt, %4, %211 : vector<4x1xi32>
    %213 = vector.shape_cast %212 : vector<4x1xi1> to vector<4x1xi1>
    %214 = vector.broadcast %213 : vector<4x1xi1> to vector<4x32xi1>
    %215 = arith.select %214, %209, %172 : vector<4x32xi1>, vector<4x32xf32>
    %216 = vector.shape_cast %212 : vector<4x1xi1> to vector<4x1xi1>
    %217 = vector.broadcast %216 : vector<4x1xi1> to vector<4x32xi1>
    %218 = arith.select %217, %207, %175 : vector<4x32xi1>, vector<4x32xf32>
    %219 = arith.index_cast %c4_i32 : i32 to index
    %c0_46 = arith.constant 0 : index
    %c0_47 = arith.constant 0 : index
    %220 = vector.load %arg5[%219, %c0_46, %c0_47] : memref<8x4x32xf32, #tpu.memory_space<vmem>>, vector<1x4x32xf32>
    %221 = vector.shape_cast %220 : vector<1x4x32xf32> to vector<4x32xf32>
    %222 = vector.shape_cast %215 : vector<4x32xf32> to vector<1x4x32xf32>
    tpu.vector_store %arg5[%219, %c0_46, %c0_47], %222 {strides = array<i32>} : memref<8x4x32xf32, #tpu.memory_space<vmem>>, vector<1x4x32xf32>,
    %c5_i32 = arith.constant 5 : i32
    %223 = arith.index_cast %c5_i32 : i32 to index
    %c0_48 = arith.constant 0 : index
    %c0_49 = arith.constant 0 : index
    %224 = vector.load %arg2[%223, %c0_48, %c0_49] : memref<8x4x128xf32, #tpu.memory_space<vmem>>, vector<1x4x128xf32>
    %225 = vector.shape_cast %224 : vector<1x4x128xf32> to vector<4x128xf32>
    %cst_50 = arith.constant dense<0.000000e+00> : vector<4x128xf32>
    %226 = tpu.matmul %215, %3, %cst_50 {dimension_numbers = #tpu.dot_dimension_numbers<[1], [0], [0], [1], [0, 0, 1, 1], [], []>} : vector<4x32xf32>, vector<32x128xf32>, vector<4x128xf32> -> vector<4x128xf32>
    %227 = arith.addf %225, %226 : vector<4x128xf32>
    %228 = vector.extract_strided_slice %227 {offsets = [0, 0], sizes = [4, 32], strides = [1, 1]} : vector<4x128xf32> to vector<4x32xf32>
    %229 = arith.negf %228 : vector<4x32xf32>
    %230 = math.exp %229 : vector<4x32xf32>
    %cst_51 = arith.constant 1.000000e+00 : f32
    %231 = vector.broadcast %cst_51 : f32 to vector<4x32xf32>
    %232 = arith.addf %231, %230 : vector<4x32xf32>
    %233 = arith.divf %231, %232 : vector<4x32xf32>
    %234 = vector.extract_strided_slice %227 {offsets = [0, 32], sizes = [4, 32], strides = [1, 1]} : vector<4x128xf32> to vector<4x32xf32>
    %235 = arith.negf %234 : vector<4x32xf32>
    %236 = math.exp %235 : vector<4x32xf32>
    %cst_52 = arith.constant 1.000000e+00 : f32
    %237 = vector.broadcast %cst_52 : f32 to vector<4x32xf32>
    %238 = arith.addf %237, %236 : vector<4x32xf32>
    %239 = arith.divf %237, %238 : vector<4x32xf32>
    %240 = vector.extract_strided_slice %227 {offsets = [0, 64], sizes = [4, 32], strides = [1, 1]} : vector<4x128xf32> to vector<4x32xf32>
    %241 = math.tanh %240 : vector<4x32xf32>
    %242 = vector.extract_strided_slice %227 {offsets = [0, 96], sizes = [4, 32], strides = [1, 1]} : vector<4x128xf32> to vector<4x32xf32>
    %243 = arith.negf %242 : vector<4x32xf32>
    %244 = math.exp %243 : vector<4x32xf32>
    %cst_53 = arith.constant 1.000000e+00 : f32
    %245 = vector.broadcast %cst_53 : f32 to vector<4x32xf32>
    %246 = arith.addf %245, %244 : vector<4x32xf32>
    %247 = arith.divf %245, %246 : vector<4x32xf32>
    %248 = arith.mulf %239, %218 : vector<4x32xf32>
    %249 = arith.mulf %233, %241 : vector<4x32xf32>
    %250 = arith.addf %248, %249 : vector<4x32xf32>
    %251 = math.tanh %250 : vector<4x32xf32>
    %252 = arith.mulf %247, %251 : vector<4x32xf32>
    %253 = arith.addi %5, %c5_i32 : i32
    %254 = vector.broadcast %253 : i32 to vector<4x1xi32>
    %255 = arith.cmpi sgt, %4, %254 : vector<4x1xi32>
    %256 = vector.shape_cast %255 : vector<4x1xi1> to vector<4x1xi1>
    %257 = vector.broadcast %256 : vector<4x1xi1> to vector<4x32xi1>
    %258 = arith.select %257, %252, %215 : vector<4x32xi1>, vector<4x32xf32>
    %259 = vector.shape_cast %255 : vector<4x1xi1> to vector<4x1xi1>
    %260 = vector.broadcast %259 : vector<4x1xi1> to vector<4x32xi1>
    %261 = arith.select %260, %250, %218 : vector<4x32xi1>, vector<4x32xf32>
    %262 = arith.index_cast %c5_i32 : i32 to index
    %c0_54 = arith.constant 0 : index
    %c0_55 = arith.constant 0 : index
    %263 = vector.load %arg5[%262, %c0_54, %c0_55] : memref<8x4x32xf32, #tpu.memory_space<vmem>>, vector<1x4x32xf32>
    %264 = vector.shape_cast %263 : vector<1x4x32xf32> to vector<4x32xf32>
    %265 = vector.shape_cast %258 : vector<4x32xf32> to vector<1x4x32xf32>
    tpu.vector_store %arg5[%262, %c0_54, %c0_55], %265 {strides = array<i32>} : memref<8x4x32xf32, #tpu.memory_space<vmem>>, vector<1x4x32xf32>,
    %c6_i32 = arith.constant 6 : i32
    %266 = arith.index_cast %c6_i32 : i32 to index
    %c0_56 = arith.constant 0 : index
    %c0_57 = arith.constant 0 : index
    %267 = vector.load %arg2[%266, %c0_56, %c0_57] : memref<8x4x128xf32, #tpu.memory_space<vmem>>, vector<1x4x128xf32>
    %268 = vector.shape_cast %267 : vector<1x4x128xf32> to vector<4x128xf32>
    %cst_58 = arith.constant dense<0.000000e+00> : vector<4x128xf32>
    %269 = tpu.matmul %258, %3, %cst_58 {dimension_numbers = #tpu.dot_dimension_numbers<[1], [0], [0], [1], [0, 0, 1, 1], [], []>} : vector<4x32xf32>, vector<32x128xf32>, vector<4x128xf32> -> vector<4x128xf32>
    %270 = arith.addf %268, %269 : vector<4x128xf32>
    %271 = vector.extract_strided_slice %270 {offsets = [0, 0], sizes = [4, 32], strides = [1, 1]} : vector<4x128xf32> to vector<4x32xf32>
    %272 = arith.negf %271 : vector<4x32xf32>
    %273 = math.exp %272 : vector<4x32xf32>
    %cst_59 = arith.constant 1.000000e+00 : f32
    %274 = vector.broadcast %cst_59 : f32 to vector<4x32xf32>
    %275 = arith.addf %274, %273 : vector<4x32xf32>
    %276 = arith.divf %274, %275 : vector<4x32xf32>
    %277 = vector.extract_strided_slice %270 {offsets = [0, 32], sizes = [4, 32], strides = [1, 1]} : vector<4x128xf32> to vector<4x32xf32>
    %278 = arith.negf %277 : vector<4x32xf32>
    %279 = math.exp %278 : vector<4x32xf32>
    %cst_60 = arith.constant 1.000000e+00 : f32
    %280 = vector.broadcast %cst_60 : f32 to vector<4x32xf32>
    %281 = arith.addf %280, %279 : vector<4x32xf32>
    %282 = arith.divf %280, %281 : vector<4x32xf32>
    %283 = vector.extract_strided_slice %270 {offsets = [0, 64], sizes = [4, 32], strides = [1, 1]} : vector<4x128xf32> to vector<4x32xf32>
    %284 = math.tanh %283 : vector<4x32xf32>
    %285 = vector.extract_strided_slice %270 {offsets = [0, 96], sizes = [4, 32], strides = [1, 1]} : vector<4x128xf32> to vector<4x32xf32>
    %286 = arith.negf %285 : vector<4x32xf32>
    %287 = math.exp %286 : vector<4x32xf32>
    %cst_61 = arith.constant 1.000000e+00 : f32
    %288 = vector.broadcast %cst_61 : f32 to vector<4x32xf32>
    %289 = arith.addf %288, %287 : vector<4x32xf32>
    %290 = arith.divf %288, %289 : vector<4x32xf32>
    %291 = arith.mulf %282, %261 : vector<4x32xf32>
    %292 = arith.mulf %276, %284 : vector<4x32xf32>
    %293 = arith.addf %291, %292 : vector<4x32xf32>
    %294 = math.tanh %293 : vector<4x32xf32>
    %295 = arith.mulf %290, %294 : vector<4x32xf32>
    %296 = arith.addi %5, %c6_i32 : i32
    %297 = vector.broadcast %296 : i32 to vector<4x1xi32>
    %298 = arith.cmpi sgt, %4, %297 : vector<4x1xi32>
    %299 = vector.shape_cast %298 : vector<4x1xi1> to vector<4x1xi1>
    %300 = vector.broadcast %299 : vector<4x1xi1> to vector<4x32xi1>
    %301 = arith.select %300, %295, %258 : vector<4x32xi1>, vector<4x32xf32>
    %302 = vector.shape_cast %298 : vector<4x1xi1> to vector<4x1xi1>
    %303 = vector.broadcast %302 : vector<4x1xi1> to vector<4x32xi1>
    %304 = arith.select %303, %293, %261 : vector<4x32xi1>, vector<4x32xf32>
    %305 = arith.index_cast %c6_i32 : i32 to index
    %c0_62 = arith.constant 0 : index
    %c0_63 = arith.constant 0 : index
    %306 = vector.load %arg5[%305, %c0_62, %c0_63] : memref<8x4x32xf32, #tpu.memory_space<vmem>>, vector<1x4x32xf32>
    %307 = vector.shape_cast %306 : vector<1x4x32xf32> to vector<4x32xf32>
    %308 = vector.shape_cast %301 : vector<4x32xf32> to vector<1x4x32xf32>
    tpu.vector_store %arg5[%305, %c0_62, %c0_63], %308 {strides = array<i32>} : memref<8x4x32xf32, #tpu.memory_space<vmem>>, vector<1x4x32xf32>,
    %c7_i32 = arith.constant 7 : i32
    %309 = arith.index_cast %c7_i32 : i32 to index
    %c0_64 = arith.constant 0 : index
    %c0_65 = arith.constant 0 : index
    %310 = vector.load %arg2[%309, %c0_64, %c0_65] : memref<8x4x128xf32, #tpu.memory_space<vmem>>, vector<1x4x128xf32>
    %311 = vector.shape_cast %310 : vector<1x4x128xf32> to vector<4x128xf32>
    %cst_66 = arith.constant dense<0.000000e+00> : vector<4x128xf32>
    %312 = tpu.matmul %301, %3, %cst_66 {dimension_numbers = #tpu.dot_dimension_numbers<[1], [0], [0], [1], [0, 0, 1, 1], [], []>} : vector<4x32xf32>, vector<32x128xf32>, vector<4x128xf32> -> vector<4x128xf32>
    %313 = arith.addf %311, %312 : vector<4x128xf32>
    %314 = vector.extract_strided_slice %313 {offsets = [0, 0], sizes = [4, 32], strides = [1, 1]} : vector<4x128xf32> to vector<4x32xf32>
    %315 = arith.negf %314 : vector<4x32xf32>
    %316 = math.exp %315 : vector<4x32xf32>
    %cst_67 = arith.constant 1.000000e+00 : f32
    %317 = vector.broadcast %cst_67 : f32 to vector<4x32xf32>
    %318 = arith.addf %317, %316 : vector<4x32xf32>
    %319 = arith.divf %317, %318 : vector<4x32xf32>
    %320 = vector.extract_strided_slice %313 {offsets = [0, 32], sizes = [4, 32], strides = [1, 1]} : vector<4x128xf32> to vector<4x32xf32>
    %321 = arith.negf %320 : vector<4x32xf32>
    %322 = math.exp %321 : vector<4x32xf32>
    %cst_68 = arith.constant 1.000000e+00 : f32
    %323 = vector.broadcast %cst_68 : f32 to vector<4x32xf32>
    %324 = arith.addf %323, %322 : vector<4x32xf32>
    %325 = arith.divf %323, %324 : vector<4x32xf32>
    %326 = vector.extract_strided_slice %313 {offsets = [0, 64], sizes = [4, 32], strides = [1, 1]} : vector<4x128xf32> to vector<4x32xf32>
    %327 = math.tanh %326 : vector<4x32xf32>
    %328 = vector.extract_strided_slice %313 {offsets = [0, 96], sizes = [4, 32], strides = [1, 1]} : vector<4x128xf32> to vector<4x32xf32>
    %329 = arith.negf %328 : vector<4x32xf32>
    %330 = math.exp %329 : vector<4x32xf32>
    %cst_69 = arith.constant 1.000000e+00 : f32
    %331 = vector.broadcast %cst_69 : f32 to vector<4x32xf32>
    %332 = arith.addf %331, %330 : vector<4x32xf32>
    %333 = arith.divf %331, %332 : vector<4x32xf32>
    %334 = arith.mulf %325, %304 : vector<4x32xf32>
    %335 = arith.mulf %319, %327 : vector<4x32xf32>
    %336 = arith.addf %334, %335 : vector<4x32xf32>
    %337 = math.tanh %336 : vector<4x32xf32>
    %338 = arith.mulf %333, %337 : vector<4x32xf32>
    %339 = arith.addi %5, %c7_i32 : i32
    %340 = vector.broadcast %339 : i32 to vector<4x1xi32>
    %341 = arith.cmpi sgt, %4, %340 : vector<4x1xi32>
    %342 = vector.shape_cast %341 : vector<4x1xi1> to vector<4x1xi1>
    %343 = vector.broadcast %342 : vector<4x1xi1> to vector<4x32xi1>
    %344 = arith.select %343, %338, %301 : vector<4x32xi1>, vector<4x32xf32>
    %345 = vector.shape_cast %341 : vector<4x1xi1> to vector<4x1xi1>
    %346 = vector.broadcast %345 : vector<4x1xi1> to vector<4x32xi1>
    %347 = arith.select %346, %336, %304 : vector<4x32xi1>, vector<4x32xf32>
    %348 = arith.index_cast %c7_i32 : i32 to index
    %c0_70 = arith.constant 0 : index
    %c0_71 = arith.constant 0 : index
    %349 = vector.load %arg5[%348, %c0_70, %c0_71] : memref<8x4x32xf32, #tpu.memory_space<vmem>>, vector<1x4x32xf32>
    %350 = vector.shape_cast %349 : vector<1x4x32xf32> to vector<4x32xf32>
    %351 = vector.shape_cast %344 : vector<4x32xf32> to vector<1x4x32xf32>
    tpu.vector_store %arg5[%348, %c0_70, %c0_71], %351 {strides = array<i32>} : memref<8x4x32xf32, #tpu.memory_space<vmem>>, vector<1x4x32xf32>,
    %c8_i32_72 = arith.constant 8 : i32
    %c0_73 = arith.constant 0 : index
    %c0_74 = arith.constant 0 : index
    %352 = vector.load %arg6[%c0_73, %c0_74] : memref<4x32xf32, #tpu.memory_space<vmem>>, vector<4x32xf32>
    tpu.vector_store %arg6[%c0_73, %c0_74], %344 {strides = array<i32>} : memref<4x32xf32, #tpu.memory_space<vmem>>, vector<4x32xf32>,
    %c0_75 = arith.constant 0 : index
    %c0_76 = arith.constant 0 : index
    %353 = vector.load %arg7[%c0_75, %c0_76] : memref<4x32xf32, #tpu.memory_space<vmem>>, vector<4x32xf32>
    tpu.vector_store %arg7[%c0_75, %c0_76], %347 {strides = array<i32>} : memref<4x32xf32, #tpu.memory_space<vmem>>, vector<4x32xf32>,
    return
  }
  func.func @transform_0(%arg0: i32, %arg1: i32) -> (i32, i32, i32) {
    %c0_i32 = arith.constant 0 : i32
    %c0_i32_0 = arith.constant 0 : i32
    return %arg1, %arg0, %c0_i32 : i32, i32, i32
  }
  func.func @transform_1(%arg0: i32, %arg1: i32) -> (i32, i32) {
    %c0_i32 = arith.constant 0 : i32
    %c0_i32_0 = arith.constant 0 : i32
    return %arg0, %c0_i32 : i32, i32
  }
  func.func @transform_2(%arg0: i32, %arg1: i32) -> (i32, i32) {
    %c0_i32 = arith.constant 0 : i32
    %c0_i32_0 = arith.constant 0 : i32
    %c0_i32_1 = arith.constant 0 : i32
    return %c0_i32, %c0_i32_0 : i32, i32
  }
  func.func @transform_3(%arg0: i32, %arg1: i32) -> (i32, i32, i32) {
    %c0_i32 = arith.constant 0 : i32
    %c0_i32_0 = arith.constant 0 : i32
    return %arg1, %arg0, %c0_i32 : i32, i32, i32
  }
}

module attributes {stable_mosaic.version = 11 : i64} {
  func.func @lstm_last_kernel(%arg0: i32, %arg1: i32, %arg2: memref<8x4x128xf32, #tpu.memory_space<vmem>>, %arg3: memref<4x1xi32, #tpu.memory_space<vmem>>, %arg4: memref<32x128xf32, #tpu.memory_space<vmem>>, %arg5: memref<32x1xf32, #tpu.memory_space<vmem>>, %arg6: memref<1x1xf32, #tpu.memory_space<vmem>>, %arg7: memref<4x1xf32, #tpu.memory_space<vmem>>, %arg8: memref<4x32xf32, #tpu.memory_space<vmem>>, %arg9: memref<4x32xf32, #tpu.memory_space<vmem>>) attributes {dimension_semantics = [#tpu.dimension_semantics<parallel>, #tpu.dimension_semantics<arbitrary>], iteration_bounds = array<i64: 1, 1>, scalar_prefetch = 0 : i64, scratch_operands = 2 : i64, tpu.core_type = #tpu.core_type<tc>, window_params = [{transform_indices = @transform_0, window_bounds = array<i64: 8, 4, 128>}, {transform_indices = @transform_1, window_bounds = array<i64: 4, 1>}, {pipeline_mode = #tpu.pipeline_mode<synchronous>, transform_indices = @transform_2, window_bounds = array<i64: 32, 128>}, {pipeline_mode = #tpu.pipeline_mode<synchronous>, transform_indices = @transform_3, window_bounds = array<i64: 32, 1>}, {pipeline_mode = #tpu.pipeline_mode<synchronous>, transform_indices = @transform_4, window_bounds = array<i64: 1, 1>}, {transform_indices = @transform_5, window_bounds = array<i64: 4, 1>}]} {
    %c0_i32 = arith.constant 0 : i32
    %0 = arith.cmpi eq, %arg1, %c0_i32 : i32
    %1 = arith.extui %0 : i1 to i32
    %c0_i32_0 = arith.constant 0 : i32
    %2 = arith.cmpi ne, %1, %c0_i32_0 : i32
    scf.if %2 {
      %cst_63 = arith.constant 0.000000e+00 : f32
      %325 = vector.broadcast %cst_63 : f32 to vector<4x32xf32>
      %c0_64 = arith.constant 0 : index
      %c0_65 = arith.constant 0 : index
      %326 = vector.load %arg8[%c0_64, %c0_65] : memref<4x32xf32, #tpu.memory_space<vmem>>, vector<4x32xf32>
      tpu.vector_store %arg8[%c0_64, %c0_65], %325 {strides = array<i32>} : memref<4x32xf32, #tpu.memory_space<vmem>>, vector<4x32xf32>,
      %cst_66 = arith.constant 0.000000e+00 : f32
      %327 = vector.broadcast %cst_66 : f32 to vector<4x32xf32>
      %c0_67 = arith.constant 0 : index
      %c0_68 = arith.constant 0 : index
      %328 = vector.load %arg9[%c0_67, %c0_68] : memref<4x32xf32, #tpu.memory_space<vmem>>, vector<4x32xf32>
      tpu.vector_store %arg9[%c0_67, %c0_68], %327 {strides = array<i32>} : memref<4x32xf32, #tpu.memory_space<vmem>>, vector<4x32xf32>,
    } else {
    }
    %c0 = arith.constant 0 : index
    %c0_1 = arith.constant 0 : index
    %3 = vector.load %arg4[%c0, %c0_1] : memref<32x128xf32, #tpu.memory_space<vmem>>, vector<32x128xf32>
    %c0_2 = arith.constant 0 : index
    %c0_3 = arith.constant 0 : index
    %4 = vector.load %arg3[%c0_2, %c0_3] : memref<4x1xi32, #tpu.memory_space<vmem>>, vector<4x1xi32>
    %c8_i32 = arith.constant 8 : i32
    %5 = arith.muli %arg1, %c8_i32 : i32
    %c0_4 = arith.constant 0 : index
    %c0_5 = arith.constant 0 : index
    %6 = vector.load %arg8[%c0_4, %c0_5] : memref<4x32xf32, #tpu.memory_space<vmem>>, vector<4x32xf32>
    %c0_6 = arith.constant 0 : index
    %c0_7 = arith.constant 0 : index
    %7 = vector.load %arg9[%c0_6, %c0_7] : memref<4x32xf32, #tpu.memory_space<vmem>>, vector<4x32xf32>
    %c0_i32_8 = arith.constant 0 : i32
    %8 = arith.index_cast %c0_i32_8 : i32 to index
    %c0_9 = arith.constant 0 : index
    %c0_10 = arith.constant 0 : index
    %9 = vector.load %arg2[%8, %c0_9, %c0_10] : memref<8x4x128xf32, #tpu.memory_space<vmem>>, vector<1x4x128xf32>
    %10 = vector.shape_cast %9 : vector<1x4x128xf32> to vector<4x128xf32>
    %cst = arith.constant dense<0.000000e+00> : vector<4x128xf32>
    %11 = tpu.matmul %6, %3, %cst {dimension_numbers = #tpu.dot_dimension_numbers<[1], [0], [0], [1], [0, 0, 1, 1], [], []>} : vector<4x32xf32>, vector<32x128xf32>, vector<4x128xf32> -> vector<4x128xf32>
    %12 = arith.addf %10, %11 : vector<4x128xf32>
    %13 = vector.extract_strided_slice %12 {offsets = [0, 0], sizes = [4, 32], strides = [1, 1]} : vector<4x128xf32> to vector<4x32xf32>
    %14 = arith.negf %13 : vector<4x32xf32>
    %15 = math.exp %14 : vector<4x32xf32>
    %cst_11 = arith.constant 1.000000e+00 : f32
    %16 = vector.broadcast %cst_11 : f32 to vector<4x32xf32>
    %17 = arith.addf %16, %15 : vector<4x32xf32>
    %18 = arith.divf %16, %17 : vector<4x32xf32>
    %19 = vector.extract_strided_slice %12 {offsets = [0, 32], sizes = [4, 32], strides = [1, 1]} : vector<4x128xf32> to vector<4x32xf32>
    %20 = arith.negf %19 : vector<4x32xf32>
    %21 = math.exp %20 : vector<4x32xf32>
    %cst_12 = arith.constant 1.000000e+00 : f32
    %22 = vector.broadcast %cst_12 : f32 to vector<4x32xf32>
    %23 = arith.addf %22, %21 : vector<4x32xf32>
    %24 = arith.divf %22, %23 : vector<4x32xf32>
    %25 = vector.extract_strided_slice %12 {offsets = [0, 64], sizes = [4, 32], strides = [1, 1]} : vector<4x128xf32> to vector<4x32xf32>
    %26 = math.tanh %25 : vector<4x32xf32>
    %27 = vector.extract_strided_slice %12 {offsets = [0, 96], sizes = [4, 32], strides = [1, 1]} : vector<4x128xf32> to vector<4x32xf32>
    %28 = arith.negf %27 : vector<4x32xf32>
    %29 = math.exp %28 : vector<4x32xf32>
    %cst_13 = arith.constant 1.000000e+00 : f32
    %30 = vector.broadcast %cst_13 : f32 to vector<4x32xf32>
    %31 = arith.addf %30, %29 : vector<4x32xf32>
    %32 = arith.divf %30, %31 : vector<4x32xf32>
    %33 = arith.mulf %24, %7 : vector<4x32xf32>
    %34 = arith.mulf %18, %26 : vector<4x32xf32>
    %35 = arith.addf %33, %34 : vector<4x32xf32>
    %36 = math.tanh %35 : vector<4x32xf32>
    %37 = arith.mulf %32, %36 : vector<4x32xf32>
    %38 = arith.addi %5, %c0_i32_8 : i32
    %39 = vector.broadcast %38 : i32 to vector<4x1xi32>
    %40 = arith.cmpi sgt, %4, %39 : vector<4x1xi32>
    %41 = vector.shape_cast %40 : vector<4x1xi1> to vector<4x1xi1>
    %42 = vector.broadcast %41 : vector<4x1xi1> to vector<4x32xi1>
    %43 = arith.select %42, %37, %6 : vector<4x32xi1>, vector<4x32xf32>
    %44 = vector.shape_cast %40 : vector<4x1xi1> to vector<4x1xi1>
    %45 = vector.broadcast %44 : vector<4x1xi1> to vector<4x32xi1>
    %46 = arith.select %45, %35, %7 : vector<4x32xi1>, vector<4x32xf32>
    %c1_i32 = arith.constant 1 : i32
    %47 = arith.index_cast %c1_i32 : i32 to index
    %c0_14 = arith.constant 0 : index
    %c0_15 = arith.constant 0 : index
    %48 = vector.load %arg2[%47, %c0_14, %c0_15] : memref<8x4x128xf32, #tpu.memory_space<vmem>>, vector<1x4x128xf32>
    %49 = vector.shape_cast %48 : vector<1x4x128xf32> to vector<4x128xf32>
    %cst_16 = arith.constant dense<0.000000e+00> : vector<4x128xf32>
    %50 = tpu.matmul %43, %3, %cst_16 {dimension_numbers = #tpu.dot_dimension_numbers<[1], [0], [0], [1], [0, 0, 1, 1], [], []>} : vector<4x32xf32>, vector<32x128xf32>, vector<4x128xf32> -> vector<4x128xf32>
    %51 = arith.addf %49, %50 : vector<4x128xf32>
    %52 = vector.extract_strided_slice %51 {offsets = [0, 0], sizes = [4, 32], strides = [1, 1]} : vector<4x128xf32> to vector<4x32xf32>
    %53 = arith.negf %52 : vector<4x32xf32>
    %54 = math.exp %53 : vector<4x32xf32>
    %cst_17 = arith.constant 1.000000e+00 : f32
    %55 = vector.broadcast %cst_17 : f32 to vector<4x32xf32>
    %56 = arith.addf %55, %54 : vector<4x32xf32>
    %57 = arith.divf %55, %56 : vector<4x32xf32>
    %58 = vector.extract_strided_slice %51 {offsets = [0, 32], sizes = [4, 32], strides = [1, 1]} : vector<4x128xf32> to vector<4x32xf32>
    %59 = arith.negf %58 : vector<4x32xf32>
    %60 = math.exp %59 : vector<4x32xf32>
    %cst_18 = arith.constant 1.000000e+00 : f32
    %61 = vector.broadcast %cst_18 : f32 to vector<4x32xf32>
    %62 = arith.addf %61, %60 : vector<4x32xf32>
    %63 = arith.divf %61, %62 : vector<4x32xf32>
    %64 = vector.extract_strided_slice %51 {offsets = [0, 64], sizes = [4, 32], strides = [1, 1]} : vector<4x128xf32> to vector<4x32xf32>
    %65 = math.tanh %64 : vector<4x32xf32>
    %66 = vector.extract_strided_slice %51 {offsets = [0, 96], sizes = [4, 32], strides = [1, 1]} : vector<4x128xf32> to vector<4x32xf32>
    %67 = arith.negf %66 : vector<4x32xf32>
    %68 = math.exp %67 : vector<4x32xf32>
    %cst_19 = arith.constant 1.000000e+00 : f32
    %69 = vector.broadcast %cst_19 : f32 to vector<4x32xf32>
    %70 = arith.addf %69, %68 : vector<4x32xf32>
    %71 = arith.divf %69, %70 : vector<4x32xf32>
    %72 = arith.mulf %63, %46 : vector<4x32xf32>
    %73 = arith.mulf %57, %65 : vector<4x32xf32>
    %74 = arith.addf %72, %73 : vector<4x32xf32>
    %75 = math.tanh %74 : vector<4x32xf32>
    %76 = arith.mulf %71, %75 : vector<4x32xf32>
    %77 = arith.addi %5, %c1_i32 : i32
    %78 = vector.broadcast %77 : i32 to vector<4x1xi32>
    %79 = arith.cmpi sgt, %4, %78 : vector<4x1xi32>
    %80 = vector.shape_cast %79 : vector<4x1xi1> to vector<4x1xi1>
    %81 = vector.broadcast %80 : vector<4x1xi1> to vector<4x32xi1>
    %82 = arith.select %81, %76, %43 : vector<4x32xi1>, vector<4x32xf32>
    %83 = vector.shape_cast %79 : vector<4x1xi1> to vector<4x1xi1>
    %84 = vector.broadcast %83 : vector<4x1xi1> to vector<4x32xi1>
    %85 = arith.select %84, %74, %46 : vector<4x32xi1>, vector<4x32xf32>
    %c2_i32 = arith.constant 2 : i32
    %86 = arith.index_cast %c2_i32 : i32 to index
    %c0_20 = arith.constant 0 : index
    %c0_21 = arith.constant 0 : index
    %87 = vector.load %arg2[%86, %c0_20, %c0_21] : memref<8x4x128xf32, #tpu.memory_space<vmem>>, vector<1x4x128xf32>
    %88 = vector.shape_cast %87 : vector<1x4x128xf32> to vector<4x128xf32>
    %cst_22 = arith.constant dense<0.000000e+00> : vector<4x128xf32>
    %89 = tpu.matmul %82, %3, %cst_22 {dimension_numbers = #tpu.dot_dimension_numbers<[1], [0], [0], [1], [0, 0, 1, 1], [], []>} : vector<4x32xf32>, vector<32x128xf32>, vector<4x128xf32> -> vector<4x128xf32>
    %90 = arith.addf %88, %89 : vector<4x128xf32>
    %91 = vector.extract_strided_slice %90 {offsets = [0, 0], sizes = [4, 32], strides = [1, 1]} : vector<4x128xf32> to vector<4x32xf32>
    %92 = arith.negf %91 : vector<4x32xf32>
    %93 = math.exp %92 : vector<4x32xf32>
    %cst_23 = arith.constant 1.000000e+00 : f32
    %94 = vector.broadcast %cst_23 : f32 to vector<4x32xf32>
    %95 = arith.addf %94, %93 : vector<4x32xf32>
    %96 = arith.divf %94, %95 : vector<4x32xf32>
    %97 = vector.extract_strided_slice %90 {offsets = [0, 32], sizes = [4, 32], strides = [1, 1]} : vector<4x128xf32> to vector<4x32xf32>
    %98 = arith.negf %97 : vector<4x32xf32>
    %99 = math.exp %98 : vector<4x32xf32>
    %cst_24 = arith.constant 1.000000e+00 : f32
    %100 = vector.broadcast %cst_24 : f32 to vector<4x32xf32>
    %101 = arith.addf %100, %99 : vector<4x32xf32>
    %102 = arith.divf %100, %101 : vector<4x32xf32>
    %103 = vector.extract_strided_slice %90 {offsets = [0, 64], sizes = [4, 32], strides = [1, 1]} : vector<4x128xf32> to vector<4x32xf32>
    %104 = math.tanh %103 : vector<4x32xf32>
    %105 = vector.extract_strided_slice %90 {offsets = [0, 96], sizes = [4, 32], strides = [1, 1]} : vector<4x128xf32> to vector<4x32xf32>
    %106 = arith.negf %105 : vector<4x32xf32>
    %107 = math.exp %106 : vector<4x32xf32>
    %cst_25 = arith.constant 1.000000e+00 : f32
    %108 = vector.broadcast %cst_25 : f32 to vector<4x32xf32>
    %109 = arith.addf %108, %107 : vector<4x32xf32>
    %110 = arith.divf %108, %109 : vector<4x32xf32>
    %111 = arith.mulf %102, %85 : vector<4x32xf32>
    %112 = arith.mulf %96, %104 : vector<4x32xf32>
    %113 = arith.addf %111, %112 : vector<4x32xf32>
    %114 = math.tanh %113 : vector<4x32xf32>
    %115 = arith.mulf %110, %114 : vector<4x32xf32>
    %116 = arith.addi %5, %c2_i32 : i32
    %117 = vector.broadcast %116 : i32 to vector<4x1xi32>
    %118 = arith.cmpi sgt, %4, %117 : vector<4x1xi32>
    %119 = vector.shape_cast %118 : vector<4x1xi1> to vector<4x1xi1>
    %120 = vector.broadcast %119 : vector<4x1xi1> to vector<4x32xi1>
    %121 = arith.select %120, %115, %82 : vector<4x32xi1>, vector<4x32xf32>
    %122 = vector.shape_cast %118 : vector<4x1xi1> to vector<4x1xi1>
    %123 = vector.broadcast %122 : vector<4x1xi1> to vector<4x32xi1>
    %124 = arith.select %123, %113, %85 : vector<4x32xi1>, vector<4x32xf32>
    %c3_i32 = arith.constant 3 : i32
    %125 = arith.index_cast %c3_i32 : i32 to index
    %c0_26 = arith.constant 0 : index
    %c0_27 = arith.constant 0 : index
    %126 = vector.load %arg2[%125, %c0_26, %c0_27] : memref<8x4x128xf32, #tpu.memory_space<vmem>>, vector<1x4x128xf32>
    %127 = vector.shape_cast %126 : vector<1x4x128xf32> to vector<4x128xf32>
    %cst_28 = arith.constant dense<0.000000e+00> : vector<4x128xf32>
    %128 = tpu.matmul %121, %3, %cst_28 {dimension_numbers = #tpu.dot_dimension_numbers<[1], [0], [0], [1], [0, 0, 1, 1], [], []>} : vector<4x32xf32>, vector<32x128xf32>, vector<4x128xf32> -> vector<4x128xf32>
    %129 = arith.addf %127, %128 : vector<4x128xf32>
    %130 = vector.extract_strided_slice %129 {offsets = [0, 0], sizes = [4, 32], strides = [1, 1]} : vector<4x128xf32> to vector<4x32xf32>
    %131 = arith.negf %130 : vector<4x32xf32>
    %132 = math.exp %131 : vector<4x32xf32>
    %cst_29 = arith.constant 1.000000e+00 : f32
    %133 = vector.broadcast %cst_29 : f32 to vector<4x32xf32>
    %134 = arith.addf %133, %132 : vector<4x32xf32>
    %135 = arith.divf %133, %134 : vector<4x32xf32>
    %136 = vector.extract_strided_slice %129 {offsets = [0, 32], sizes = [4, 32], strides = [1, 1]} : vector<4x128xf32> to vector<4x32xf32>
    %137 = arith.negf %136 : vector<4x32xf32>
    %138 = math.exp %137 : vector<4x32xf32>
    %cst_30 = arith.constant 1.000000e+00 : f32
    %139 = vector.broadcast %cst_30 : f32 to vector<4x32xf32>
    %140 = arith.addf %139, %138 : vector<4x32xf32>
    %141 = arith.divf %139, %140 : vector<4x32xf32>
    %142 = vector.extract_strided_slice %129 {offsets = [0, 64], sizes = [4, 32], strides = [1, 1]} : vector<4x128xf32> to vector<4x32xf32>
    %143 = math.tanh %142 : vector<4x32xf32>
    %144 = vector.extract_strided_slice %129 {offsets = [0, 96], sizes = [4, 32], strides = [1, 1]} : vector<4x128xf32> to vector<4x32xf32>
    %145 = arith.negf %144 : vector<4x32xf32>
    %146 = math.exp %145 : vector<4x32xf32>
    %cst_31 = arith.constant 1.000000e+00 : f32
    %147 = vector.broadcast %cst_31 : f32 to vector<4x32xf32>
    %148 = arith.addf %147, %146 : vector<4x32xf32>
    %149 = arith.divf %147, %148 : vector<4x32xf32>
    %150 = arith.mulf %141, %124 : vector<4x32xf32>
    %151 = arith.mulf %135, %143 : vector<4x32xf32>
    %152 = arith.addf %150, %151 : vector<4x32xf32>
    %153 = math.tanh %152 : vector<4x32xf32>
    %154 = arith.mulf %149, %153 : vector<4x32xf32>
    %155 = arith.addi %5, %c3_i32 : i32
    %156 = vector.broadcast %155 : i32 to vector<4x1xi32>
    %157 = arith.cmpi sgt, %4, %156 : vector<4x1xi32>
    %158 = vector.shape_cast %157 : vector<4x1xi1> to vector<4x1xi1>
    %159 = vector.broadcast %158 : vector<4x1xi1> to vector<4x32xi1>
    %160 = arith.select %159, %154, %121 : vector<4x32xi1>, vector<4x32xf32>
    %161 = vector.shape_cast %157 : vector<4x1xi1> to vector<4x1xi1>
    %162 = vector.broadcast %161 : vector<4x1xi1> to vector<4x32xi1>
    %163 = arith.select %162, %152, %124 : vector<4x32xi1>, vector<4x32xf32>
    %c4_i32 = arith.constant 4 : i32
    %164 = arith.index_cast %c4_i32 : i32 to index
    %c0_32 = arith.constant 0 : index
    %c0_33 = arith.constant 0 : index
    %165 = vector.load %arg2[%164, %c0_32, %c0_33] : memref<8x4x128xf32, #tpu.memory_space<vmem>>, vector<1x4x128xf32>
    %166 = vector.shape_cast %165 : vector<1x4x128xf32> to vector<4x128xf32>
    %cst_34 = arith.constant dense<0.000000e+00> : vector<4x128xf32>
    %167 = tpu.matmul %160, %3, %cst_34 {dimension_numbers = #tpu.dot_dimension_numbers<[1], [0], [0], [1], [0, 0, 1, 1], [], []>} : vector<4x32xf32>, vector<32x128xf32>, vector<4x128xf32> -> vector<4x128xf32>
    %168 = arith.addf %166, %167 : vector<4x128xf32>
    %169 = vector.extract_strided_slice %168 {offsets = [0, 0], sizes = [4, 32], strides = [1, 1]} : vector<4x128xf32> to vector<4x32xf32>
    %170 = arith.negf %169 : vector<4x32xf32>
    %171 = math.exp %170 : vector<4x32xf32>
    %cst_35 = arith.constant 1.000000e+00 : f32
    %172 = vector.broadcast %cst_35 : f32 to vector<4x32xf32>
    %173 = arith.addf %172, %171 : vector<4x32xf32>
    %174 = arith.divf %172, %173 : vector<4x32xf32>
    %175 = vector.extract_strided_slice %168 {offsets = [0, 32], sizes = [4, 32], strides = [1, 1]} : vector<4x128xf32> to vector<4x32xf32>
    %176 = arith.negf %175 : vector<4x32xf32>
    %177 = math.exp %176 : vector<4x32xf32>
    %cst_36 = arith.constant 1.000000e+00 : f32
    %178 = vector.broadcast %cst_36 : f32 to vector<4x32xf32>
    %179 = arith.addf %178, %177 : vector<4x32xf32>
    %180 = arith.divf %178, %179 : vector<4x32xf32>
    %181 = vector.extract_strided_slice %168 {offsets = [0, 64], sizes = [4, 32], strides = [1, 1]} : vector<4x128xf32> to vector<4x32xf32>
    %182 = math.tanh %181 : vector<4x32xf32>
    %183 = vector.extract_strided_slice %168 {offsets = [0, 96], sizes = [4, 32], strides = [1, 1]} : vector<4x128xf32> to vector<4x32xf32>
    %184 = arith.negf %183 : vector<4x32xf32>
    %185 = math.exp %184 : vector<4x32xf32>
    %cst_37 = arith.constant 1.000000e+00 : f32
    %186 = vector.broadcast %cst_37 : f32 to vector<4x32xf32>
    %187 = arith.addf %186, %185 : vector<4x32xf32>
    %188 = arith.divf %186, %187 : vector<4x32xf32>
    %189 = arith.mulf %180, %163 : vector<4x32xf32>
    %190 = arith.mulf %174, %182 : vector<4x32xf32>
    %191 = arith.addf %189, %190 : vector<4x32xf32>
    %192 = math.tanh %191 : vector<4x32xf32>
    %193 = arith.mulf %188, %192 : vector<4x32xf32>
    %194 = arith.addi %5, %c4_i32 : i32
    %195 = vector.broadcast %194 : i32 to vector<4x1xi32>
    %196 = arith.cmpi sgt, %4, %195 : vector<4x1xi32>
    %197 = vector.shape_cast %196 : vector<4x1xi1> to vector<4x1xi1>
    %198 = vector.broadcast %197 : vector<4x1xi1> to vector<4x32xi1>
    %199 = arith.select %198, %193, %160 : vector<4x32xi1>, vector<4x32xf32>
    %200 = vector.shape_cast %196 : vector<4x1xi1> to vector<4x1xi1>
    %201 = vector.broadcast %200 : vector<4x1xi1> to vector<4x32xi1>
    %202 = arith.select %201, %191, %163 : vector<4x32xi1>, vector<4x32xf32>
    %c5_i32 = arith.constant 5 : i32
    %203 = arith.index_cast %c5_i32 : i32 to index
    %c0_38 = arith.constant 0 : index
    %c0_39 = arith.constant 0 : index
    %204 = vector.load %arg2[%203, %c0_38, %c0_39] : memref<8x4x128xf32, #tpu.memory_space<vmem>>, vector<1x4x128xf32>
    %205 = vector.shape_cast %204 : vector<1x4x128xf32> to vector<4x128xf32>
    %cst_40 = arith.constant dense<0.000000e+00> : vector<4x128xf32>
    %206 = tpu.matmul %199, %3, %cst_40 {dimension_numbers = #tpu.dot_dimension_numbers<[1], [0], [0], [1], [0, 0, 1, 1], [], []>} : vector<4x32xf32>, vector<32x128xf32>, vector<4x128xf32> -> vector<4x128xf32>
    %207 = arith.addf %205, %206 : vector<4x128xf32>
    %208 = vector.extract_strided_slice %207 {offsets = [0, 0], sizes = [4, 32], strides = [1, 1]} : vector<4x128xf32> to vector<4x32xf32>
    %209 = arith.negf %208 : vector<4x32xf32>
    %210 = math.exp %209 : vector<4x32xf32>
    %cst_41 = arith.constant 1.000000e+00 : f32
    %211 = vector.broadcast %cst_41 : f32 to vector<4x32xf32>
    %212 = arith.addf %211, %210 : vector<4x32xf32>
    %213 = arith.divf %211, %212 : vector<4x32xf32>
    %214 = vector.extract_strided_slice %207 {offsets = [0, 32], sizes = [4, 32], strides = [1, 1]} : vector<4x128xf32> to vector<4x32xf32>
    %215 = arith.negf %214 : vector<4x32xf32>
    %216 = math.exp %215 : vector<4x32xf32>
    %cst_42 = arith.constant 1.000000e+00 : f32
    %217 = vector.broadcast %cst_42 : f32 to vector<4x32xf32>
    %218 = arith.addf %217, %216 : vector<4x32xf32>
    %219 = arith.divf %217, %218 : vector<4x32xf32>
    %220 = vector.extract_strided_slice %207 {offsets = [0, 64], sizes = [4, 32], strides = [1, 1]} : vector<4x128xf32> to vector<4x32xf32>
    %221 = math.tanh %220 : vector<4x32xf32>
    %222 = vector.extract_strided_slice %207 {offsets = [0, 96], sizes = [4, 32], strides = [1, 1]} : vector<4x128xf32> to vector<4x32xf32>
    %223 = arith.negf %222 : vector<4x32xf32>
    %224 = math.exp %223 : vector<4x32xf32>
    %cst_43 = arith.constant 1.000000e+00 : f32
    %225 = vector.broadcast %cst_43 : f32 to vector<4x32xf32>
    %226 = arith.addf %225, %224 : vector<4x32xf32>
    %227 = arith.divf %225, %226 : vector<4x32xf32>
    %228 = arith.mulf %219, %202 : vector<4x32xf32>
    %229 = arith.mulf %213, %221 : vector<4x32xf32>
    %230 = arith.addf %228, %229 : vector<4x32xf32>
    %231 = math.tanh %230 : vector<4x32xf32>
    %232 = arith.mulf %227, %231 : vector<4x32xf32>
    %233 = arith.addi %5, %c5_i32 : i32
    %234 = vector.broadcast %233 : i32 to vector<4x1xi32>
    %235 = arith.cmpi sgt, %4, %234 : vector<4x1xi32>
    %236 = vector.shape_cast %235 : vector<4x1xi1> to vector<4x1xi1>
    %237 = vector.broadcast %236 : vector<4x1xi1> to vector<4x32xi1>
    %238 = arith.select %237, %232, %199 : vector<4x32xi1>, vector<4x32xf32>
    %239 = vector.shape_cast %235 : vector<4x1xi1> to vector<4x1xi1>
    %240 = vector.broadcast %239 : vector<4x1xi1> to vector<4x32xi1>
    %241 = arith.select %240, %230, %202 : vector<4x32xi1>, vector<4x32xf32>
    %c6_i32 = arith.constant 6 : i32
    %242 = arith.index_cast %c6_i32 : i32 to index
    %c0_44 = arith.constant 0 : index
    %c0_45 = arith.constant 0 : index
    %243 = vector.load %arg2[%242, %c0_44, %c0_45] : memref<8x4x128xf32, #tpu.memory_space<vmem>>, vector<1x4x128xf32>
    %244 = vector.shape_cast %243 : vector<1x4x128xf32> to vector<4x128xf32>
    %cst_46 = arith.constant dense<0.000000e+00> : vector<4x128xf32>
    %245 = tpu.matmul %238, %3, %cst_46 {dimension_numbers = #tpu.dot_dimension_numbers<[1], [0], [0], [1], [0, 0, 1, 1], [], []>} : vector<4x32xf32>, vector<32x128xf32>, vector<4x128xf32> -> vector<4x128xf32>
    %246 = arith.addf %244, %245 : vector<4x128xf32>
    %247 = vector.extract_strided_slice %246 {offsets = [0, 0], sizes = [4, 32], strides = [1, 1]} : vector<4x128xf32> to vector<4x32xf32>
    %248 = arith.negf %247 : vector<4x32xf32>
    %249 = math.exp %248 : vector<4x32xf32>
    %cst_47 = arith.constant 1.000000e+00 : f32
    %250 = vector.broadcast %cst_47 : f32 to vector<4x32xf32>
    %251 = arith.addf %250, %249 : vector<4x32xf32>
    %252 = arith.divf %250, %251 : vector<4x32xf32>
    %253 = vector.extract_strided_slice %246 {offsets = [0, 32], sizes = [4, 32], strides = [1, 1]} : vector<4x128xf32> to vector<4x32xf32>
    %254 = arith.negf %253 : vector<4x32xf32>
    %255 = math.exp %254 : vector<4x32xf32>
    %cst_48 = arith.constant 1.000000e+00 : f32
    %256 = vector.broadcast %cst_48 : f32 to vector<4x32xf32>
    %257 = arith.addf %256, %255 : vector<4x32xf32>
    %258 = arith.divf %256, %257 : vector<4x32xf32>
    %259 = vector.extract_strided_slice %246 {offsets = [0, 64], sizes = [4, 32], strides = [1, 1]} : vector<4x128xf32> to vector<4x32xf32>
    %260 = math.tanh %259 : vector<4x32xf32>
    %261 = vector.extract_strided_slice %246 {offsets = [0, 96], sizes = [4, 32], strides = [1, 1]} : vector<4x128xf32> to vector<4x32xf32>
    %262 = arith.negf %261 : vector<4x32xf32>
    %263 = math.exp %262 : vector<4x32xf32>
    %cst_49 = arith.constant 1.000000e+00 : f32
    %264 = vector.broadcast %cst_49 : f32 to vector<4x32xf32>
    %265 = arith.addf %264, %263 : vector<4x32xf32>
    %266 = arith.divf %264, %265 : vector<4x32xf32>
    %267 = arith.mulf %258, %241 : vector<4x32xf32>
    %268 = arith.mulf %252, %260 : vector<4x32xf32>
    %269 = arith.addf %267, %268 : vector<4x32xf32>
    %270 = math.tanh %269 : vector<4x32xf32>
    %271 = arith.mulf %266, %270 : vector<4x32xf32>
    %272 = arith.addi %5, %c6_i32 : i32
    %273 = vector.broadcast %272 : i32 to vector<4x1xi32>
    %274 = arith.cmpi sgt, %4, %273 : vector<4x1xi32>
    %275 = vector.shape_cast %274 : vector<4x1xi1> to vector<4x1xi1>
    %276 = vector.broadcast %275 : vector<4x1xi1> to vector<4x32xi1>
    %277 = arith.select %276, %271, %238 : vector<4x32xi1>, vector<4x32xf32>
    %278 = vector.shape_cast %274 : vector<4x1xi1> to vector<4x1xi1>
    %279 = vector.broadcast %278 : vector<4x1xi1> to vector<4x32xi1>
    %280 = arith.select %279, %269, %241 : vector<4x32xi1>, vector<4x32xf32>
    %c7_i32 = arith.constant 7 : i32
    %281 = arith.index_cast %c7_i32 : i32 to index
    %c0_50 = arith.constant 0 : index
    %c0_51 = arith.constant 0 : index
    %282 = vector.load %arg2[%281, %c0_50, %c0_51] : memref<8x4x128xf32, #tpu.memory_space<vmem>>, vector<1x4x128xf32>
    %283 = vector.shape_cast %282 : vector<1x4x128xf32> to vector<4x128xf32>
    %cst_52 = arith.constant dense<0.000000e+00> : vector<4x128xf32>
    %284 = tpu.matmul %277, %3, %cst_52 {dimension_numbers = #tpu.dot_dimension_numbers<[1], [0], [0], [1], [0, 0, 1, 1], [], []>} : vector<4x32xf32>, vector<32x128xf32>, vector<4x128xf32> -> vector<4x128xf32>
    %285 = arith.addf %283, %284 : vector<4x128xf32>
    %286 = vector.extract_strided_slice %285 {offsets = [0, 0], sizes = [4, 32], strides = [1, 1]} : vector<4x128xf32> to vector<4x32xf32>
    %287 = arith.negf %286 : vector<4x32xf32>
    %288 = math.exp %287 : vector<4x32xf32>
    %cst_53 = arith.constant 1.000000e+00 : f32
    %289 = vector.broadcast %cst_53 : f32 to vector<4x32xf32>
    %290 = arith.addf %289, %288 : vector<4x32xf32>
    %291 = arith.divf %289, %290 : vector<4x32xf32>
    %292 = vector.extract_strided_slice %285 {offsets = [0, 32], sizes = [4, 32], strides = [1, 1]} : vector<4x128xf32> to vector<4x32xf32>
    %293 = arith.negf %292 : vector<4x32xf32>
    %294 = math.exp %293 : vector<4x32xf32>
    %cst_54 = arith.constant 1.000000e+00 : f32
    %295 = vector.broadcast %cst_54 : f32 to vector<4x32xf32>
    %296 = arith.addf %295, %294 : vector<4x32xf32>
    %297 = arith.divf %295, %296 : vector<4x32xf32>
    %298 = vector.extract_strided_slice %285 {offsets = [0, 64], sizes = [4, 32], strides = [1, 1]} : vector<4x128xf32> to vector<4x32xf32>
    %299 = math.tanh %298 : vector<4x32xf32>
    %300 = vector.extract_strided_slice %285 {offsets = [0, 96], sizes = [4, 32], strides = [1, 1]} : vector<4x128xf32> to vector<4x32xf32>
    %301 = arith.negf %300 : vector<4x32xf32>
    %302 = math.exp %301 : vector<4x32xf32>
    %cst_55 = arith.constant 1.000000e+00 : f32
    %303 = vector.broadcast %cst_55 : f32 to vector<4x32xf32>
    %304 = arith.addf %303, %302 : vector<4x32xf32>
    %305 = arith.divf %303, %304 : vector<4x32xf32>
    %306 = arith.mulf %297, %280 : vector<4x32xf32>
    %307 = arith.mulf %291, %299 : vector<4x32xf32>
    %308 = arith.addf %306, %307 : vector<4x32xf32>
    %309 = math.tanh %308 : vector<4x32xf32>
    %310 = arith.mulf %305, %309 : vector<4x32xf32>
    %311 = arith.addi %5, %c7_i32 : i32
    %312 = vector.broadcast %311 : i32 to vector<4x1xi32>
    %313 = arith.cmpi sgt, %4, %312 : vector<4x1xi32>
    %314 = vector.shape_cast %313 : vector<4x1xi1> to vector<4x1xi1>
    %315 = vector.broadcast %314 : vector<4x1xi1> to vector<4x32xi1>
    %316 = arith.select %315, %310, %277 : vector<4x32xi1>, vector<4x32xf32>
    %317 = vector.shape_cast %313 : vector<4x1xi1> to vector<4x1xi1>
    %318 = vector.broadcast %317 : vector<4x1xi1> to vector<4x32xi1>
    %319 = arith.select %318, %308, %280 : vector<4x32xi1>, vector<4x32xf32>
    %c8_i32_56 = arith.constant 8 : i32
    %c0_57 = arith.constant 0 : index
    %c0_58 = arith.constant 0 : index
    %320 = vector.load %arg8[%c0_57, %c0_58] : memref<4x32xf32, #tpu.memory_space<vmem>>, vector<4x32xf32>
    tpu.vector_store %arg8[%c0_57, %c0_58], %316 {strides = array<i32>} : memref<4x32xf32, #tpu.memory_space<vmem>>, vector<4x32xf32>,
    %c0_59 = arith.constant 0 : index
    %c0_60 = arith.constant 0 : index
    %321 = vector.load %arg9[%c0_59, %c0_60] : memref<4x32xf32, #tpu.memory_space<vmem>>, vector<4x32xf32>
    tpu.vector_store %arg9[%c0_59, %c0_60], %319 {strides = array<i32>} : memref<4x32xf32, #tpu.memory_space<vmem>>, vector<4x32xf32>,
    %c0_i32_61 = arith.constant 0 : i32
    %322 = arith.cmpi eq, %arg1, %c0_i32_61 : i32
    %323 = arith.extui %322 : i1 to i32
    %c0_i32_62 = arith.constant 0 : i32
    %324 = arith.cmpi ne, %323, %c0_i32_62 : i32
    scf.if %324 {
      %c0_63 = arith.constant 0 : index
      %c0_64 = arith.constant 0 : index
      %325 = vector.load %arg5[%c0_63, %c0_64] : memref<32x1xf32, #tpu.memory_space<vmem>>, vector<32x1xf32>
      %cst_65 = arith.constant dense<0.000000e+00> : vector<4x1xf32>
      %326 = tpu.matmul %316, %325, %cst_65 {dimension_numbers = #tpu.dot_dimension_numbers<[1], [0], [0], [1], [0, 0, 1, 1], [], []>} : vector<4x32xf32>, vector<32x1xf32>, vector<4x1xf32> -> vector<4x1xf32>
      %c0_66 = arith.constant 0 : index
      %c0_67 = arith.constant 0 : index
      %327 = vector.load %arg6[%c0_66, %c0_67] : memref<1x1xf32, #tpu.memory_space<vmem>>, vector<1x1xf32>
      %328 = vector.broadcast %327 : vector<1x1xf32> to vector<4x1xf32>
      %329 = arith.addf %326, %328 : vector<4x1xf32>
      %c0_68 = arith.constant 0 : index
      %c0_69 = arith.constant 0 : index
      %330 = vector.load %arg7[%c0_68, %c0_69] : memref<4x1xf32, #tpu.memory_space<vmem>>, vector<4x1xf32>
      tpu.vector_store %arg7[%c0_68, %c0_69], %329 {strides = array<i32>} : memref<4x1xf32, #tpu.memory_space<vmem>>, vector<4x1xf32>,
    } else {
    }
    return
  }
  func.func @transform_0(%arg0: i32, %arg1: i32) -> (i32, i32, i32) {
    %c0_i32 = arith.constant 0 : i32
    %c0_i32_0 = arith.constant 0 : i32
    return %arg1, %arg0, %c0_i32 : i32, i32, i32
  }
  func.func @transform_1(%arg0: i32, %arg1: i32) -> (i32, i32) {
    %c0_i32 = arith.constant 0 : i32
    %c0_i32_0 = arith.constant 0 : i32
    return %arg0, %c0_i32 : i32, i32
  }
  func.func @transform_2(%arg0: i32, %arg1: i32) -> (i32, i32) {
    %c0_i32 = arith.constant 0 : i32
    %c0_i32_0 = arith.constant 0 : i32
    %c0_i32_1 = arith.constant 0 : i32
    return %c0_i32, %c0_i32_0 : i32, i32
  }
  func.func @transform_3(%arg0: i32, %arg1: i32) -> (i32, i32) {
    %c0_i32 = arith.constant 0 : i32
    %c0_i32_0 = arith.constant 0 : i32
    %c0_i32_1 = arith.constant 0 : i32
    return %c0_i32, %c0_i32_0 : i32, i32
  }
  func.func @transform_4(%arg0: i32, %arg1: i32) -> (i32, i32) {
    %c0_i32 = arith.constant 0 : i32
    %c0_i32_0 = arith.constant 0 : i32
    %c0_i32_1 = arith.constant 0 : i32
    return %c0_i32, %c0_i32_0 : i32, i32
  }
  func.func @transform_5(%arg0: i32, %arg1: i32) -> (i32, i32) {
    %c0_i32 = arith.constant 0 : i32
    %c0_i32_0 = arith.constant 0 : i32
    return %arg0, %c0_i32 : i32, i32
  }
}

</mosaic_0001>

<llo_original>
// kernel: baseline_lstm_regressor_forward.6
$region0: #{baseline_lstm_regressor_forward.6}
  #allocation0 [shape = 'u32[]', space=smem, size = 0x4, offset = 0x4, fixed_abs, tag = 'smem constant byte address 0x4 - core index']
  #allocation1 [shape = 'u32[72,128]{1,0:T(1,128)}', space=vmem, size = 0x9000, scoped, tag = 'internal scratch']
  %s0 = inlined_call_operand.vmem [shape: f32[32,32], index: 0, kind: input, shape index: {}]
  %s1 = inlined_call_operand.vmem [shape: f32[32,128], index: 1, kind: input, shape index: {}]
  %s2 = inlined_call_operand.vmem [shape: f32[1,128], index: 2, kind: input, shape index: {}]
  %s3 = inlined_call_operand.vmem [shape: f32[32,128], index: 3, kind: output, shape index: {}]
  %s4 = sld [smem:[#allocation0]]
  $region22: #{baseline_lstm_regressor_forward.6} parent=0
    _
  %s6 = ssub.s32 1, %s4
  %s7 = scalar_select 0, %s6, %s4
  // Predicated region
  $region2: #{baseline_lstm_regressor_forward.6} parent=0 // pred_check
    _
  $region3: #{baseline_lstm_regressor_forward.6} parent=0 // pred_check_branch
    %9 = sbr.rel (0) target = $region5
  $region4: #{baseline_lstm_regressor_forward.6} parent=0 // pred_region
    _
  $region5: #{baseline_lstm_regressor_forward.6} parent=0 // pred_fallthru
    _
  // Predicated region
  $region6: #{baseline_lstm_regressor_forward.6} parent=0 // pred_check
    _
  $region7: #{baseline_lstm_regressor_forward.6} parent=0 // pred_check_branch
    %11 = sbr.rel (0) target = $region9
  $region8: #{baseline_lstm_regressor_forward.6} parent=0 // pred_region
    _
  $region9: #{baseline_lstm_regressor_forward.6} parent=0 // pred_fallthru
    _
  // Predicated region
  $region10: #{baseline_lstm_regressor_forward.6} parent=0 // pred_check
    _
  $region11: #{baseline_lstm_regressor_forward.6} parent=0 // pred_check_branch
    %13 = sbr.rel (0) target = $region13
  $region12: #{baseline_lstm_regressor_forward.6} parent=0 // pred_region
    _
  $region13: #{baseline_lstm_regressor_forward.6} parent=0 // pred_fallthru
    _
  %v14 = vld [vmem:[%s0] sm:$0xff]
  %v15 = vld [vmem:[%s0 + $0x8] sm:$0xff]
  %v16 = vld [vmem:[%s0 + $0x10] sm:$0xff]
  %v17 = vld [vmem:[%s0 + $0x18] sm:$0xff]
  %v18 = vld [vmem:[%s1] sm:$0xff]
  %v19 = vld [vmem:[%s1 + $0x8] sm:$0xff]
  %v20 = vld [vmem:[%s1 + $0x10] sm:$0xff]
  %v21 = vld [vmem:[%s1 + $0x18] sm:$0xff]
  %v22 = vld [vmem:[%s2] sm:$0x1]
  %v24 = vperm.slane %v22, 0
  %vm26 = vcmask 261120
  %v28 = vsel %vm26, %v14, 0
  %v31 = vsel %vm26, %v15, 0
  %v34 = vsel %vm26, %v16, 0
  %v37 = vsel %vm26, %v17, 0
  %39 = vmatpush.msra.mxu0 0.0
  %40 = vmatpush.msra.mxu0 0.0
  %41 = vmatpush.msra.mxu0 0.0
  %42 = vmatpush.msra.mxu0 0.0
  %43 = vmatpush.msra.mxu0 0.0
  %44 = vmatpush.msra.mxu0 0.0
  %45 = vmatpush.msra.mxu0 0.0
  %46 = vmatpush.msra.mxu0 0.0
  %47 = vmatpush.msra.mxu0 0.0
  %48 = vmatpush.msra.mxu0 0.0
  %49 = vmatpush.msra.mxu0 0.0
  %50 = vmatpush.msra.mxu0 0.0
  %51 = vmatpush.msra.mxu0 %v21
  %52 = vmatpush.msra.mxu0 %v20
  %53 = vmatpush.msra.mxu0 %v19
  %54 = vmatpush.msra.mxu0 %v18
  %55 = vmatmul.f32.gmra.mxu0 %v28
  %v56 = vpop.f32.mrf.mxu0
  %v57 = vadd.f32 %v24, %v56
  %58 = vmatmul.f32.gmra.mxu0 %v31
  %v59 = vpop.f32.mrf.mxu0
  %v60 = vadd.f32 %v24, %v59
  %61 = vmatmul.f32.gmra.mxu0 %v34
  %v62 = vpop.f32.mrf.mxu0
  %v63 = vadd.f32 %v24, %v62
  %64 = vmatmul.f32.gmra.mxu0 %v37
  %v65 = vpop.f32.mrf.mxu0
  %v66 = vadd.f32 %v24, %v65
  %67 = vdwg.mxu0
  %68 = vst [vmem:[%s3] sm:$0xff] %v57
  %69 = vst [vmem:[%s3 + $0x8] sm:$0xff] %v60
  %70 = vst [vmem:[%s3 + $0x10] sm:$0xff] %v63
  %71 = vst [vmem:[%s3 + $0x18] sm:$0xff] %v66
  // Predicated region
  $region14: #{baseline_lstm_regressor_forward.6} parent=0 // pred_check
    _
  $region15: #{baseline_lstm_regressor_forward.6} parent=0 // pred_check_branch
    %73 = sbr.rel (0) target = $region17
  $region16: #{baseline_lstm_regressor_forward.6} parent=0 // pred_region
    _
  $region17: #{baseline_lstm_regressor_forward.6} parent=0 // pred_fallthru
    _
  // Predicated region
  $region18: #{baseline_lstm_regressor_forward.6} parent=0 // pred_check
    _
  $region19: #{baseline_lstm_regressor_forward.6} parent=0 // pred_check_branch
    %75 = sbr.rel (0) target = $region21
  $region20: #{baseline_lstm_regressor_forward.6} parent=0 // pred_region
    _
  $region21: #{baseline_lstm_regressor_forward.6} parent=0 // pred_fallthru
    _

// kernel: baseline_lstm_regressor_forward.4
$region0: #{baseline_lstm_regressor_forward.4}
  #allocation0 [shape = 'u32[]', space=smem, size = 0x4, offset = 0x4, fixed_abs, tag = 'smem constant byte address 0x4 - core index']
  #allocation1 [shape = 'u32[72,128]{1,0:T(1,128)}', space=vmem, size = 0x9000, scoped, tag = 'internal scratch']
  %s0 = inlined_call_operand.vmem [shape: f32[32,16], index: 0, kind: input, shape index: {}]
  %s1 = inlined_call_operand.hbm [shape: f32[16,128], index: 1, kind: input, shape index: {}]
  %s2 = inlined_call_operand.vmem [shape: f32[1,128], index: 2, kind: input, shape index: {}]
  %s3 = inlined_call_operand.vmem [shape: f32[32,128], index: 3, kind: output, shape index: {}]
  %s4 = sld [smem:[#allocation0]]
  $region26: #{baseline_lstm_regressor_forward.4} parent=0
    _
  %s6 = ssub.s32 1, %s4
  %s7 = scalar_select 0, %s6, %s4
  $region1: #{baseline_lstm_regressor_forward.4} parent=0
    #allocation2 [shape = 'u8[8192]{0}', space=vmem, size = 0x2000, scoped, tag = 'input window, operand 1, single buffered']
    #allocation3 [shape = 's32[1]{0}', space=sflag, size = 0x4, scoped, tag = 'scoped memory for baseline_lstm_regressor_forward.4']
    %8 = vsyncpa [#allocation3], 0
    // Predicated region
    $region2: #{baseline_lstm_regressor_forward.4} parent=1 // pred_check
      _
    $region3: #{baseline_lstm_regressor_forward.4} parent=1 // pred_check_branch
      %10 = sbr.rel (0) target = $region5
    $region4: #{baseline_lstm_regressor_forward.4} parent=1 // pred_region
      _
    $region5: #{baseline_lstm_regressor_forward.4} parent=1 // pred_fallthru
      _
    // Predicated region
    $region6: #{baseline_lstm_regressor_forward.4} parent=1 // pred_check
      _
    $region7: #{baseline_lstm_regressor_forward.4} parent=1 // pred_check_branch
      %12 = sbr.rel (0) target = $region9
    $region8: #{baseline_lstm_regressor_forward.4} parent=1 // pred_region
      %14 = vsyncadd [#allocation3], 0
      %s15 = sshll.u32 %s1, 4
      %s16 = int_to_ptr.hbm [resolvable:$true] %s15
      %s17 = sshll.u32 [#allocation2], 4
      %s18 = int_to_ptr.vmem [resolvable:$true] %s17
      %23 = dma.hbm_to_vmem [thread:$0]  %s16, 256, %s18, [#allocation3], 128, 128, 8
    $region9: #{baseline_lstm_regressor_forward.4} parent=1 // pred_fallthru
      _
    // Predicated region
    $region10: #{baseline_lstm_regressor_forward.4} parent=1 // pred_check
      _
    $region11: #{baseline_lstm_regressor_forward.4} parent=1 // pred_check_branch
      %25 = sbr.rel (0) target = $region13
    $region12: #{baseline_lstm_regressor_forward.4} parent=1 // pred_region
      _
    $region13: #{baseline_lstm_regressor_forward.4} parent=1 // pred_fallthru
      _
    // Predicated region
    $region14: #{baseline_lstm_regressor_forward.4} parent=1 // pred_check
      _
    $region15: #{baseline_lstm_regressor_forward.4} parent=1 // pred_check_branch
      %27 = sbr.rel (0) target = $region17
    $region16: #{baseline_lstm_regressor_forward.4} parent=1 // pred_region
      %29 = dma.done [#allocation3], 256
    $region17: #{baseline_lstm_regressor_forward.4} parent=1 // pred_fallthru
      _
    %v30 = vld [vmem:[%s0] sm:$0xff]
    %v31 = vld [vmem:[%s0 + $0x8] sm:$0xff]
    %v32 = vld [vmem:[%s0 + $0x10] sm:$0xff]
    %v33 = vld [vmem:[%s0 + $0x18] sm:$0xff]
    %v34 = vld [vmem:[#allocation2] sm:$0xff]
    %v35 = vld [vmem:[#allocation2 + $0x8] sm:$0xff]
    %v36 = vld [vmem:[%s2] sm:$0x1]
    %v38 = vperm.slane %v36, 0
    %vm40 = vcmask 130048
    %v42 = vsel %vm40, %v30, 0
    %v45 = vsel %vm40, %v31, 0
    %v48 = vsel %vm40, %v32, 0
    %v51 = vsel %vm40, %v33, 0
    %53 = vmatpush.msra.mxu0 0.0
    %54 = vmatpush.msra.mxu0 0.0
    %55 = vmatpush.msra.mxu0 0.0
    %56 = vmatpush.msra.mxu0 0.0
    %57 = vmatpush.msra.mxu0 0.0
    %58 = vmatpush.msra.mxu0 0.0
    %59 = vmatpush.msra.mxu0 0.0
    %60 = vmatpush.msra.mxu0 0.0
    %61 = vmatpush.msra.mxu0 0.0
    %62 = vmatpush.msra.mxu0 0.0
    %63 = vmatpush.msra.mxu0 0.0
    %64 = vmatpush.msra.mxu0 0.0
    %65 = vmatpush.msra.mxu0 0.0
    %66 = vmatpush.msra.mxu0 0.0
    %67 = vmatpush.msra.mxu0 %v35
    %68 = vmatpush.msra.mxu0 %v34
    %69 = vmatmul.f32.gmra.mxu0 %v42
    %v70 = vpop.f32.mrf.mxu0
    %v71 = vadd.f32 %v38, %v70
    %72 = vmatmul.f32.gmra.mxu0 %v45
    %v73 = vpop.f32.mrf.mxu0
    %v74 = vadd.f32 %v38, %v73
    %75 = vmatmul.f32.gmra.mxu0 %v48
    %v76 = vpop.f32.mrf.mxu0
    %v77 = vadd.f32 %v38, %v76
    %78 = vmatmul.f32.gmra.mxu0 %v51
    %v79 = vpop.f32.mrf.mxu0
    %v80 = vadd.f32 %v38, %v79
    %81 = vdwg.mxu0
    %82 = vst [vmem:[%s3] sm:$0xff] %v71
    %83 = vst [vmem:[%s3 + $0x8] sm:$0xff] %v74
    %84 = vst [vmem:[%s3 + $0x10] sm:$0xff] %v77
    %85 = vst [vmem:[%s3 + $0x18] sm:$0xff] %v80
    // Predicated region
    $region18: #{baseline_lstm_regressor_forward.4} parent=1 // pred_check
      _
    $region19: #{baseline_lstm_regressor_forward.4} parent=1 // pred_check_branch
      %87 = sbr.rel (0) target = $region21
    $region20: #{baseline_lstm_regressor_forward.4} parent=1 // pred_region
      _
    $region21: #{baseline_lstm_regressor_forward.4} parent=1 // pred_fallthru
      _
    // Predicated region
    $region22: #{baseline_lstm_regressor_forward.4} parent=1 // pred_check
      _
    $region23: #{baseline_lstm_regressor_forward.4} parent=1 // pred_check_branch
      %89 = sbr.rel (0) target = $region25
    $region24: #{baseline_lstm_regressor_forward.4} parent=1 // pred_region
      _
    $region25: #{baseline_lstm_regressor_forward.4} parent=1 // pred_fallthru
      _
    %90 = vsyncpa [#allocation3], 1

// kernel: baseline_lstm_regressor_forward.7
$region0: #{baseline_lstm_regressor_forward.7}
  #allocation0 [shape = 'u32[]', space=smem, size = 0x4, offset = 0x4, fixed_abs, tag = 'smem constant byte address 0x4 - core index']
  #allocation1 [shape = 'u32[72,128]{1,0:T(1,128)}', space=vmem, size = 0x9000, scoped, tag = 'internal scratch']
  #allocation2 [shape = 'f32[4,32]{1,0:T(4,128)}', space=vmem, size = 0x800, scoped, tag = 'scratch operand']
  #allocation3 [shape = 'f32[4,32]{1,0:T(4,128)}', space=vmem, size = 0x800, scoped, tag = 'scratch operand']
  #allocation4 [shape = 'f32[1,1]{1,0:T(1,128)S(1)}', space=vmem, size = 0x200, scoped, tag = 'scoped memory for baseline_lstm_regressor_forward.7']
  %s0 = inlined_call_operand.vmem [shape: f32[8,4,128], index: 0, kind: input, shape index: {}]
  %s1 = inlined_call_operand.vmem [shape: s32[4,1], index: 1, kind: input, shape index: {}]
  %s2 = inlined_call_operand.vmem [shape: f32[32,128], index: 2, kind: input, shape index: {}]
  %s3 = inlined_call_operand.vmem [shape: f32[32,1], index: 3, kind: input, shape index: {}]
  %s4 = inlined_call_operand.<no memory space> [shape: f32[1,1], index: 4, kind: input, shape index: {}]
  %s5 = inlined_call_operand.vmem [shape: f32[4,1], index: 5, kind: output, shape index: {}]
  %s6 = sld [smem:[#allocation0]]
  $region38: #{baseline_lstm_regressor_forward.7} parent=0
    _
  %s8 = ssub.s32 1, %s6
  %s9 = scalar_select 0, %s8, %s6
  %v10 = vstv %s4
  %11 = vst [vmem:[#allocation4] sm:$0x1] %v10
  // Predicated region
  $region2: #{baseline_lstm_regressor_forward.7} parent=0 // pred_check
    _
  $region3: #{baseline_lstm_regressor_forward.7} parent=0 // pred_check_branch
    %13 = sbr.rel (0) target = $region5
  $region4: #{baseline_lstm_regressor_forward.7} parent=0 // pred_region
    _
  $region5: #{baseline_lstm_regressor_forward.7} parent=0 // pred_fallthru
    _
  // Predicated region
  $region6: #{baseline_lstm_regressor_forward.7} parent=0 // pred_check
    _
  $region7: #{baseline_lstm_regressor_forward.7} parent=0 // pred_check_branch
    %15 = sbr.rel (0) target = $region9
  $region8: #{baseline_lstm_regressor_forward.7} parent=0 // pred_region
    _
  $region9: #{baseline_lstm_regressor_forward.7} parent=0 // pred_fallthru
    _
  // Predicated region
  $region10: #{baseline_lstm_regressor_forward.7} parent=0 // pred_check
    _
  $region11: #{baseline_lstm_regressor_forward.7} parent=0 // pred_check_branch
    %17 = sbr.rel (0) target = $region13
  $region12: #{baseline_lstm_regressor_forward.7} parent=0 // pred_region
    _
  $region13: #{baseline_lstm_regressor_forward.7} parent=0 // pred_fallthru
    _
  // Predicated region
  $region14: #{baseline_lstm_regressor_forward.7} parent=0 // pred_check
    _
  $region15: #{baseline_lstm_regressor_forward.7} parent=0 // pred_check_branch
    %19 = sbr.rel (0) target = $region17
  $region16: #{baseline_lstm_regressor_forward.7} parent=0 // pred_region
    _
  $region17: #{baseline_lstm_regressor_forward.7} parent=0 // pred_fallthru
    _
  // Predicated region
  $region18: #{baseline_lstm_regressor_forward.7} parent=0 // pred_check
    _
  $region19: #{baseline_lstm_regressor_forward.7} parent=0 // pred_check_branch
    %21 = sbr.rel (0) target = $region21
  $region20: #{baseline_lstm_regressor_forward.7} parent=0 // pred_region
    _
  $region21: #{baseline_lstm_regressor_forward.7} parent=0 // pred_fallthru
    _
  %p22 = scmp.eq.s32.totalorder 0, 0
  // Predicated region
  $region22: #{baseline_lstm_regressor_forward.7} parent=0 // pred_check
    %p23 = pneg %p22
  $region23: #{baseline_lstm_regressor_forward.7} parent=0 // pred_check_branch
    %25 = sbr.rel (%p23) target = $region25
  $region24: #{baseline_lstm_regressor_forward.7} parent=0 // pred_region
    %vm26 = vcmask 257024
    %27 = vst.msk [vmem:[#allocation2] sm:$0xf] %vm26, 0.0
    %28 = vst.msk [vmem:[#allocation3] sm:$0xf] %vm26, 0.0
  $region25: #{baseline_lstm_regressor_forward.7} parent=0 // pred_fallthru
    _
  %v29 = vld [vmem:[%s2] sm:$0xff]
  %v30 = vld [vmem:[%s2 + $0x8] sm:$0xff]
  %v31 = vld [vmem:[%s2 + $0x10] sm:$0xff]
  %v32 = vld [vmem:[%s2 + $0x18] sm:$0xff]
  %v33 = vld [vmem:[%s1] sm:$0xf]
  %s34 = smul.u32 0, 8
  %v35 = vld [vmem:[#allocation2] sm:$0xf]
  %v36 = vld [vmem:[#allocation3] sm:$0xf]
  %v37 = vld [vmem:[%s0] sm:$0xf]
  %vm38 = vcmask 261120
  %v40 = vsel %vm38, %v35, 0
  %42 = vmatpush.msra.mxu0 0.0
  %43 = vmatpush.msra.mxu0 0.0
  %44 = vmatpush.msra.mxu0 0.0
  %45 = vmatpush.msra.mxu0 0.0
  %46 = vmatpush.msra.mxu0 0.0
  %47 = vmatpush.msra.mxu0 0.0
  %48 = vmatpush.msra.mxu0 0.0
  %49 = vmatpush.msra.mxu0 0.0
  %50 = vmatpush.msra.mxu0 0.0
  %51 = vmatpush.msra.mxu0 0.0
  %52 = vmatpush.msra.mxu0 0.0
  %53 = vmatpush.msra.mxu0 0.0
  %54 = vmatpush.msra.mxu0 %v32
  %55 = vmatpush.msra.mxu0 %v31
  %56 = vmatpush.msra.mxu0 %v30
  %57 = vmatpush.msra.mxu0 %v29
  %58 = vmatmul.f32.gmra.mxu0 %v40
  %v59 = vpop.f32.mrf.mxu0
  %v60 = vadd.f32 0.0, %v59
  %61 = vdwg.mxu0
  %v62 = vadd.f32 %v37, %v60
  %v63 = vxor.u32 %v62, 2147483648
  %v64 = vmul.f32 %v63, 1.442695
  %v65 = vpow.pop %v64
  %v66 = vadd.f32 %v65, 1.0
  %v67 = vrcp.pop %v66
  %v68 = vmul.f32 %v66, %v67
  %v69 = vsub.f32 1.0, %v68
  %v70 = vmul.f32 %v67, %v69
  %v71 = vadd.f32 %v67, %v70
  %vm72 = vweird.f32 %v66
  %vm73 = vweird.f32 %v67
  %vm74 = vmor %vm72, %vm73
  %v75 = vsel %vm74, %v67, %v71
  %v76 = vand.u32 2147483647, %v66
  %vm77 = vcmp.eq.f32.partialorder %v76, 8.507059e+37
  %v78 = vand.u32 %v66, 2147483648
  %v79 = vor.u32 1.1754944e-38, %v78
  %v80 = vsel %vm77, %v79, %v75
  %v81 = vmul.f32 1.0, %v80
  %v82 = vtanh.pop %v62
  %84 = vrot.lane.b32.xlu0 %v36, 32
  %v85 = vpop.permute.xlu0 %84
  %v87 = vmul.f32 %v81, %v85
  %89 = vrot.lane.b32.xlu0 %v82, 64
  %v90 = vpop.permute.xlu0 %89
  %v92 = vmul.f32 %v81, %v90
  %94 = vrot.lane.b32.xlu0 %v92, 32
  %v95 = vpop.permute.xlu0 %94
  %v97 = vadd.f32 %v87, %v95
  %v98 = vtanh.pop %v97
  %100 = vrot.lane.b32.xlu0 %v98, 64
  %v101 = vpop.permute.xlu0 %100
  %v103 = vmul.f32 %v81, %v101
  %v104 = vstv %s34
  %vm105 = vcmp.gt.s32.totalorder %v33, %v104
  %v106 = vsel %vm105, 1, 0
  %107 = vset.pattern.permute.xlu0 0
  %108 = vperm.xlu0 %107, %v106
  %v109 = vpop.permute.xlu0 %108
  %vm110 = vcmp.eq.s32.totalorder %v109, 1
  %111 = vrot.lane.b32.xlu0 %v35, 96
  %v112 = vpop.permute.xlu0 %111
  %v114 = vsel %vm110, %v103, %v112
  %v115 = vsel %vm110, %v97, %v85
  %s116 = scalar_lea.vmem %s0, 4
  %v117 = vld [vmem:[%s116] sm:$0xf]
  %119 = vrot.lane.b32.xlu0 %v114, 32
  %v120 = vpop.permute.xlu0 %119
  %v121 = vsel %vm38, %v120, 0
  %123 = vmatpush.msra.mxu0 0.0
  %124 = vmatpush.msra.mxu0 0.0
  %125 = vmatpush.msra.mxu0 0.0
  %126 = vmatpush.msra.mxu0 0.0
  %127 = vmatpush.msra.mxu0 0.0
  %128 = vmatpush.msra.mxu0 0.0
  %129 = vmatpush.msra.mxu0 0.0
  %130 = vmatpush.msra.mxu0 0.0
  %131 = vmatpush.msra.mxu0 0.0
  %132 = vmatpush.msra.mxu0 0.0
  %133 = vmatpush.msra.mxu0 0.0
  %134 = vmatpush.msra.mxu0 0.0
  %135 = vmatpush.msra.mxu0 %v32
  %136 = vmatpush.msra.mxu0 %v31
  %137 = vmatpush.msra.mxu0 %v30
  %138 = vmatpush.msra.mxu0 %v29
  %139 = vmatmul.f32.gmra.mxu0 %v121
  %v140 = vpop.f32.mrf.mxu0
  %v141 = vadd.f32 0.0, %v140
  %142 = vdwg.mxu0
  %v143 = vadd.f32 %v117, %v141
  %v144 = vxor.u32 %v143, 2147483648
  %v145 = vmul.f32 %v144, 1.442695
  %v146 = vpow.pop %v145
  %v147 = vadd.f32 %v146, 1.0
  %v148 = vrcp.pop %v147
  %v149 = vmul.f32 %v147, %v148
  %v150 = vsub.f32 1.0, %v149
  %v151 = vmul.f32 %v148, %v150
  %v152 = vadd.f32 %v148, %v151
  %vm153 = vweird.f32 %v147
  %vm154 = vweird.f32 %v148
  %vm155 = vmor %vm153, %vm154
  %v156 = vsel %vm155, %v148, %v152
  %v157 = vand.u32 2147483647, %v147
  %vm158 = vcmp.eq.f32.partialorder %v157, 8.507059e+37
  %v159 = vand.u32 %v147, 2147483648
  %v160 = vor.u32 1.1754944e-38, %v159
  %v161 = vsel %vm158, %v160, %v156
  %v162 = vmul.f32 1.0, %v161
  %v163 = vtanh.pop %v143
  %v164 = vmul.f32 %v162, %v115
  %166 = vrot.lane.b32.xlu0 %v163, 64
  %v167 = vpop.permute.xlu0 %166
  %v169 = vmul.f32 %v162, %v167
  %171 = vrot.lane.b32.xlu0 %v169, 32
  %v172 = vpop.permute.xlu0 %171
  %v174 = vadd.f32 %v164, %v172
  %v175 = vtanh.pop %v174
  %177 = vrot.lane.b32.xlu0 %v175, 64
  %v178 = vpop.permute.xlu0 %177
  %v180 = vmul.f32 %v162, %v178
  %s181 = sadd.s32 %s34, 1
  %v182 = vstv %s181
  %vm183 = vcmp.gt.s32.totalorder %v33, %v182
  %v184 = vsel %vm183, 1, 0
  %185 = vset.pattern.permute.xlu0 0
  %186 = vperm.xlu0 %185, %v184
  %v187 = vpop.permute.xlu0 %186
  %vm188 = vcmp.eq.s32.totalorder %v187, 1
  %v189 = vsel %vm188, %v180, %v114
  %v190 = vsel %vm188, %v174, %v115
  %s191 = scalar_lea.vmem %s0, 8
  %v192 = vld [vmem:[%s191] sm:$0xf]
  %194 = vrot.lane.b32.xlu0 %v189, 32
  %v195 = vpop.permute.xlu0 %194
  %v196 = vsel %vm38, %v195, 0
  %198 = vmatpush.msra.mxu0 0.0
  %199 = vmatpush.msra.mxu0 0.0
  %200 = vmatpush.msra.mxu0 0.0
  %201 = vmatpush.msra.mxu0 0.0
  %202 = vmatpush.msra.mxu0 0.0
  %203 = vmatpush.msra.mxu0 0.0
  %204 = vmatpush.msra.mxu0 0.0
  %205 = vmatpush.msra.mxu0 0.0
  %206 = vmatpush.msra.mxu0 0.0
  %207 = vmatpush.msra.mxu0 0.0
  %208 = vmatpush.msra.mxu0 0.0
  %209 = vmatpush.msra.mxu0 0.0
  %210 = vmatpush.msra.mxu0 %v32
  %211 = vmatpush.msra.mxu0 %v31
  %212 = vmatpush.msra.mxu0 %v30
  %213 = vmatpush.msra.mxu0 %v29
  %214 = vmatmul.f32.gmra.mxu0 %v196
  %v215 = vpop.f32.mrf.mxu0
  %v216 = vadd.f32 0.0, %v215
  %217 = vdwg.mxu0
  %v218 = vadd.f32 %v192, %v216
  %v219 = vxor.u32 %v218, 2147483648
  %v220 = vmul.f32 %v219, 1.442695
  %v221 = vpow.pop %v220
  %v222 = vadd.f32 %v221, 1.0
  %v223 = vrcp.pop %v222
  %v224 = vmul.f32 %v222, %v223
  %v225 = vsub.f32 1.0, %v224
  %v226 = vmul.f32 %v223, %v225
  %v227 = vadd.f32 %v223, %v226
  %vm228 = vweird.f32 %v222
  %vm229 = vweird.f32 %v223
  %vm230 = vmor %vm228, %vm229
  %v231 = vsel %vm230, %v223, %v227
  %v232 = vand.u32 2147483647, %v222
  %vm233 = vcmp.eq.f32.partialorder %v232, 8.507059e+37
  %v234 = vand.u32 %v222, 2147483648
  %v235 = vor.u32 1.1754944e-38, %v234
  %v236 = vsel %vm233, %v235, %v231
  %v237 = vmul.f32 1.0, %v236
  %v238 = vtanh.pop %v218
  %v239 = vmul.f32 %v237, %v190
  %241 = vrot.lane.b32.xlu0 %v238, 64
  %v242 = vpop.permute.xlu0 %241
  %v244 = vmul.f32 %v237, %v242
  %246 = vrot.lane.b32.xlu0 %v244, 32
  %v247 = vpop.permute.xlu0 %246
  %v249 = vadd.f32 %v239, %v247
  %v250 = vtanh.pop %v249
  %252 = vrot.lane.b32.xlu0 %v250, 64
  %v253 = vpop.permute.xlu0 %252
  %v255 = vmul.f32 %v237, %v253
  %s256 = sadd.s32 %s34, 2
  %v257 = vstv %s256
  %vm258 = vcmp.gt.s32.totalorder %v33, %v257
  %v259 = vsel %vm258, 1, 0
  %260 = vset.pattern.permute.xlu0 0
  %261 = vperm.xlu0 %260, %v259
  %v262 = vpop.permute.xlu0 %261
  %vm263 = vcmp.eq.s32.totalorder %v262, 1
  %v264 = vsel %vm263, %v255, %v189
  %v265 = vsel %vm263, %v249, %v190
  %s266 = scalar_lea.vmem %s0, 12
  %v267 = vld [vmem:[%s266] sm:$0xf]
  %269 = vrot.lane.b32.xlu0 %v264, 32
  %v270 = vpop.permute.xlu0 %269
  %v271 = vsel %vm38, %v270, 0
  %273 = vmatpush.msra.mxu0 0.0
  %274 = vmatpush.msra.mxu0 0.0
  %275 = vmatpush.msra.mxu0 0.0
  %276 = vmatpush.msra.mxu0 0.0
  %277 = vmatpush.msra.mxu0 0.0
  %278 = vmatpush.msra.mxu0 0.0
  %279 = vmatpush.msra.mxu0 0.0
  %280 = vmatpush.msra.mxu0 0.0
  %281 = vmatpush.msra.mxu0 0.0
  %282 = vmatpush.msra.mxu0 0.0
  %283 = vmatpush.msra.mxu0 0.0
  %284 = vmatpush.msra.mxu0 0.0
  %285 = vmatpush.msra.mxu0 %v32
  %286 = vmatpush.msra.mxu0 %v31
  %287 = vmatpush.msra.mxu0 %v30
  %288 = vmatpush.msra.mxu0 %v29
  %289 = vmatmul.f32.gmra.mxu0 %v271
  %v290 = vpop.f32.mrf.mxu0
  %v291 = vadd.f32 0.0, %v290
  %292 = vdwg.mxu0
  %v293 = vadd.f32 %v267, %v291
  %v294 = vxor.u32 %v293, 2147483648
  %v295 = vmul.f32 %v294, 1.442695
  %v296 = vpow.pop %v295
  %v297 = vadd.f32 %v296, 1.0
  %v298 = vrcp.pop %v297
  %v299 = vmul.f32 %v297, %v298
  %v300 = vsub.f32 1.0, %v299
  %v301 = vmul.f32 %v298, %v300
  %v302 = vadd.f32 %v298, %v301
  %vm303 = vweird.f32 %v297
  %vm304 = vweird.f32 %v298
  %vm305 = vmor %vm303, %vm304
  %v306 = vsel %vm305, %v298, %v302
  %v307 = vand.u32 2147483647, %v297
  %vm308 = vcmp.eq.f32.partialorder %v307, 8.507059e+37
  %v309 = vand.u32 %v297, 2147483648
  %v310 = vor.u32 1.1754944e-38, %v309
  %v311 = vsel %vm308, %v310, %v306
  %v312 = vmul.f32 1.0, %v311
  %v313 = vtanh.pop %v293
  %v314 = vmul.f32 %v312, %v265
  %316 = vrot.lane.b32.xlu0 %v313, 64
  %v317 = vpop.permute.xlu0 %316
  %v319 = vmul.f32 %v312, %v317
  %321 = vrot.lane.b32.xlu0 %v319, 32
  %v322 = vpop.permute.xlu0 %321
  %v324 = vadd.f32 %v314, %v322
  %v325 = vtanh.pop %v324
  %327 = vrot.lane.b32.xlu0 %v325, 64
  %v328 = vpop.permute.xlu0 %327
  %v330 = vmul.f32 %v312, %v328
  %s331 = sadd.s32 %s34, 3
  %v332 = vstv %s331
  %vm333 = vcmp.gt.s32.totalorder %v33, %v332
  %v334 = vsel %vm333, 1, 0
  %335 = vset.pattern.permute.xlu0 0
  %336 = vperm.xlu0 %335, %v334
  %v337 = vpop.permute.xlu0 %336
  %vm338 = vcmp.eq.s32.totalorder %v337, 1
  %v339 = vsel %vm338, %v330, %v264
  %v340 = vsel %vm338, %v324, %v265
  %s341 = scalar_lea.vmem %s0, 16
  %v342 = vld [vmem:[%s341] sm:$0xf]
  %344 = vrot.lane.b32.xlu0 %v339, 32
  %v345 = vpop.permute.xlu0 %344
  %v346 = vsel %vm38, %v345, 0
  %348 = vmatpush.msra.mxu0 0.0
  %349 = vmatpush.msra.mxu0 0.0
  %350 = vmatpush.msra.mxu0 0.0
  %351 = vmatpush.msra.mxu0 0.0
  %352 = vmatpush.msra.mxu0 0.0
  %353 = vmatpush.msra.mxu0 0.0
  %354 = vmatpush.msra.mxu0 0.0
  %355 = vmatpush.msra.mxu0 0.0
  %356 = vmatpush.msra.mxu0 0.0
  %357 = vmatpush.msra.mxu0 0.0
  %358 = vmatpush.msra.mxu0 0.0
  %359 = vmatpush.msra.mxu0 0.0
  %360 = vmatpush.msra.mxu0 %v32
  %361 = vmatpush.msra.mxu0 %v31
  %362 = vmatpush.msra.mxu0 %v30
  %363 = vmatpush.msra.mxu0 %v29
  %364 = vmatmul.f32.gmra.mxu0 %v346
  %v365 = vpop.f32.mrf.mxu0
  %v366 = vadd.f32 0.0, %v365
  %367 = vdwg.mxu0
  %v368 = vadd.f32 %v342, %v366
  %v369 = vxor.u32 %v368, 2147483648
  %v370 = vmul.f32 %v369, 1.442695
  %v371 = vpow.pop %v370
  %v372 = vadd.f32 %v371, 1.0
  %v373 = vrcp.pop %v372
  %v374 = vmul.f32 %v372, %v373
  %v375 = vsub.f32 1.0, %v374
  %v376 = vmul.f32 %v373, %v375
  %v377 = vadd.f32 %v373, %v376
  %vm378 = vweird.f32 %v372
  %vm379 = vweird.f32 %v373
  %vm380 = vmor %vm378, %vm379
  %v381 = vsel %vm380, %v373, %v377
  %v382 = vand.u32 2147483647, %v372
  %vm383 = vcmp.eq.f32.partialorder %v382, 8.507059e+37
  %v384 = vand.u32 %v372, 2147483648
  %v385 = vor.u32 1.1754944e-38, %v384
  %v386 = vsel %vm383, %v385, %v381
  %v387 = vmul.f32 1.0, %v386
  %v388 = vtanh.pop %v368
  %v389 = vmul.f32 %v387, %v340
  %391 = vrot.lane.b32.xlu0 %v388, 64
  %v392 = vpop.permute.xlu0 %391
  %v394 = vmul.f32 %v387, %v392
  %396 = vrot.lane.b32.xlu0 %v394, 32
  %v397 = vpop.permute.xlu0 %396
  %v399 = vadd.f32 %v389, %v397
  %v400 = vtanh.pop %v399
  %402 = vrot.lane.b32.xlu0 %v400, 64
  %v403 = vpop.permute.xlu0 %402
  %v405 = vmul.f32 %v387, %v403
  %s406 = sadd.s32 %s34, 4
  %v407 = vstv %s406
  %vm408 = vcmp.gt.s32.totalorder %v33, %v407
  %v409 = vsel %vm408, 1, 0
  %410 = vset.pattern.permute.xlu0 0
  %411 = vperm.xlu0 %410, %v409
  %v412 = vpop.permute.xlu0 %411
  %vm413 = vcmp.eq.s32.totalorder %v412, 1
  %v414 = vsel %vm413, %v405, %v339
  %v415 = vsel %vm413, %v399, %v340
  %s416 = scalar_lea.vmem %s0, 20
  %v417 = vld [vmem:[%s416] sm:$0xf]
  %419 = vrot.lane.b32.xlu0 %v414, 32
  %v420 = vpop.permute.xlu0 %419
  %v421 = vsel %vm38, %v420, 0
  %423 = vmatpush.msra.mxu0 0.0
  %424 = vmatpush.msra.mxu0 0.0
  %425 = vmatpush.msra.mxu0 0.0
  %426 = vmatpush.msra.mxu0 0.0
  %427 = vmatpush.msra.mxu0 0.0
  %428 = vmatpush.msra.mxu0 0.0
  %429 = vmatpush.msra.mxu0 0.0
  %430 = vmatpush.msra.mxu0 0.0
  %431 = vmatpush.msra.mxu0 0.0
  %432 = vmatpush.msra.mxu0 0.0
  %433 = vmatpush.msra.mxu0 0.0
  %434 = vmatpush.msra.mxu0 0.0
  %435 = vmatpush.msra.mxu0 %v32
  %436 = vmatpush.msra.mxu0 %v31
  %437 = vmatpush.msra.mxu0 %v30
  %438 = vmatpush.msra.mxu0 %v29
  %439 = vmatmul.f32.gmra.mxu0 %v421
  %v440 = vpop.f32.mrf.mxu0
  %v441 = vadd.f32 0.0, %v440
  %442 = vdwg.mxu0
  %v443 = vadd.f32 %v417, %v441
  %v444 = vxor.u32 %v443, 2147483648
  %v445 = vmul.f32 %v444, 1.442695
  %v446 = vpow.pop %v445
  %v447 = vadd.f32 %v446, 1.0
  %v448 = vrcp.pop %v447
  %v449 = vmul.f32 %v447, %v448
  %v450 = vsub.f32 1.0, %v449
  %v451 = vmul.f32 %v448, %v450
  %v452 = vadd.f32 %v448, %v451
  %vm453 = vweird.f32 %v447
  %vm454 = vweird.f32 %v448
  %vm455 = vmor %vm453, %vm454
  %v456 = vsel %vm455, %v448, %v452
  %v457 = vand.u32 2147483647, %v447
  %vm458 = vcmp.eq.f32.partialorder %v457, 8.507059e+37
  %v459 = vand.u32 %v447, 2147483648
  %v460 = vor.u32 1.1754944e-38, %v459
  %v461 = vsel %vm458, %v460, %v456
  %v462 = vmul.f32 1.0, %v461
  %v463 = vtanh.pop %v443
  %v464 = vmul.f32 %v462, %v415
  %466 = vrot.lane.b32.xlu0 %v463, 64
  %v467 = vpop.permute.xlu0 %466
  %v469 = vmul.f32 %v462, %v467
  %471 = vrot.lane.b32.xlu0 %v469, 32
  %v472 = vpop.permute.xlu0 %471
  %v474 = vadd.f32 %v464, %v472
  %v475 = vtanh.pop %v474
  %477 = vrot.lane.b32.xlu0 %v475, 64
  %v478 = vpop.permute.xlu0 %477
  %v480 = vmul.f32 %v462, %v478
  %s481 = sadd.s32 %s34, 5
  %v482 = vstv %s481
  %vm483 = vcmp.gt.s32.totalorder %v33, %v482
  %v484 = vsel %vm483, 1, 0
  %485 = vset.pattern.permute.xlu0 0
  %486 = vperm.xlu0 %485, %v484
  %v487 = vpop.permute.xlu0 %486
  %vm488 = vcmp.eq.s32.totalorder %v487, 1
  %v489 = vsel %vm488, %v480, %v414
  %v490 = vsel %vm488, %v474, %v415
  %s491 = scalar_lea.vmem %s0, 24
  %v492 = vld [vmem:[%s491] sm:$0xf]
  %494 = vrot.lane.b32.xlu0 %v489, 32
  %v495 = vpop.permute.xlu0 %494
  %v496 = vsel %vm38, %v495, 0
  %498 = vmatpush.msra.mxu0 0.0
  %499 = vmatpush.msra.mxu0 0.0
  %500 = vmatpush.msra.mxu0 0.0
  %501 = vmatpush.msra.mxu0 0.0
  %502 = vmatpush.msra.mxu0 0.0
  %503 = vmatpush.msra.mxu0 0.0
  %504 = vmatpush.msra.mxu0 0.0
  %505 = vmatpush.msra.mxu0 0.0
  %506 = vmatpush.msra.mxu0 0.0
  %507 = vmatpush.msra.mxu0 0.0
  %508 = vmatpush.msra.mxu0 0.0
  %509 = vmatpush.msra.mxu0 0.0
  %510 = vmatpush.msra.mxu0 %v32
  %511 = vmatpush.msra.mxu0 %v31
  %512 = vmatpush.msra.mxu0 %v30
  %513 = vmatpush.msra.mxu0 %v29
  %514 = vmatmul.f32.gmra.mxu0 %v496
  %v515 = vpop.f32.mrf.mxu0
  %v516 = vadd.f32 0.0, %v515
  %517 = vdwg.mxu0
  %v518 = vadd.f32 %v492, %v516
  %v519 = vxor.u32 %v518, 2147483648
  %v520 = vmul.f32 %v519, 1.442695
  %v521 = vpow.pop %v520
  %v522 = vadd.f32 %v521, 1.0
  %v523 = vrcp.pop %v522
  %v524 = vmul.f32 %v522, %v523
  %v525 = vsub.f32 1.0, %v524
  %v526 = vmul.f32 %v523, %v525
  %v527 = vadd.f32 %v523, %v526
  %vm528 = vweird.f32 %v522
  %vm529 = vweird.f32 %v523
  %vm530 = vmor %vm528, %vm529
  %v531 = vsel %vm530, %v523, %v527
  %v532 = vand.u32 2147483647, %v522
  %vm533 = vcmp.eq.f32.partialorder %v532, 8.507059e+37
  %v534 = vand.u32 %v522, 2147483648
  %v535 = vor.u32 1.1754944e-38, %v534
  %v536 = vsel %vm533, %v535, %v531
  %v537 = vmul.f32 1.0, %v536
  %v538 = vtanh.pop %v518
  %v539 = vmul.f32 %v537, %v490
  %541 = vrot.lane.b32.xlu0 %v538, 64
  %v542 = vpop.permute.xlu0 %541
  %v544 = vmul.f32 %v537, %v542
  %546 = vrot.lane.b32.xlu0 %v544, 32
  %v547 = vpop.permute.xlu0 %546
  %v549 = vadd.f32 %v539, %v547
  %v550 = vtanh.pop %v549
  %552 = vrot.lane.b32.xlu0 %v550, 64
  %v553 = vpop.permute.xlu0 %552
  %v555 = vmul.f32 %v537, %v553
  %s556 = sadd.s32 %s34, 6
  %v557 = vstv %s556
  %vm558 = vcmp.gt.s32.totalorder %v33, %v557
  %v559 = vsel %vm558, 1, 0
  %560 = vset.pattern.permute.xlu0 0
  %561 = vperm.xlu0 %560, %v559
  %v562 = vpop.permute.xlu0 %561
  %vm563 = vcmp.eq.s32.totalorder %v562, 1
  %v564 = vsel %vm563, %v555, %v489
  %v565 = vsel %vm563, %v549, %v490
  %s566 = scalar_lea.vmem %s0, 28
  %v567 = vld [vmem:[%s566] sm:$0xf]
  %569 = vrot.lane.b32.xlu0 %v564, 32
  %v570 = vpop.permute.xlu0 %569
  %v571 = vsel %vm38, %v570, 0
  %573 = vmatpush.msra.mxu0 0.0
  %574 = vmatpush.msra.mxu0 0.0
  %575 = vmatpush.msra.mxu0 0.0
  %576 = vmatpush.msra.mxu0 0.0
  %577 = vmatpush.msra.mxu0 0.0
  %578 = vmatpush.msra.mxu0 0.0
  %579 = vmatpush.msra.mxu0 0.0
  %580 = vmatpush.msra.mxu0 0.0
  %581 = vmatpush.msra.mxu0 0.0
  %582 = vmatpush.msra.mxu0 0.0
  %583 = vmatpush.msra.mxu0 0.0
  %584 = vmatpush.msra.mxu0 0.0
  %585 = vmatpush.msra.mxu0 %v32
  %586 = vmatpush.msra.mxu0 %v31
  %587 = vmatpush.msra.mxu0 %v30
  %588 = vmatpush.msra.mxu0 %v29
  %589 = vmatmul.f32.gmra.mxu0 %v571
  %v590 = vpop.f32.mrf.mxu0
  %v591 = vadd.f32 0.0, %v590
  %592 = vdwg.mxu0
  %v593 = vadd.f32 %v567, %v591
  %v594 = vxor.u32 %v593, 2147483648
  %v595 = vmul.f32 %v594, 1.442695
  %v596 = vpow.pop %v595
  %v597 = vadd.f32 %v596, 1.0
  %v598 = vrcp.pop %v597
  %v599 = vmul.f32 %v597, %v598
  %v600 = vsub.f32 1.0, %v599
  %v601 = vmul.f32 %v598, %v600
  %v602 = vadd.f32 %v598, %v601
  %vm603 = vweird.f32 %v597
  %vm604 = vweird.f32 %v598
  %vm605 = vmor %vm603, %vm604
  %v606 = vsel %vm605, %v598, %v602
  %v607 = vand.u32 2147483647, %v597
  %vm608 = vcmp.eq.f32.partialorder %v607, 8.507059e+37
  %v609 = vand.u32 %v597, 2147483648
  %v610 = vor.u32 1.1754944e-38, %v609
  %v611 = vsel %vm608, %v610, %v606
  %v612 = vmul.f32 1.0, %v611
  %v613 = vtanh.pop %v593
  %v614 = vmul.f32 %v612, %v565
  %616 = vrot.lane.b32.xlu0 %v613, 64
  %v617 = vpop.permute.xlu0 %616
  %v619 = vmul.f32 %v612, %v617
  %621 = vrot.lane.b32.xlu0 %v619, 32
  %v622 = vpop.permute.xlu0 %621
  %v624 = vadd.f32 %v614, %v622
  %v625 = vtanh.pop %v624
  %627 = vrot.lane.b32.xlu0 %v625, 64
  %v628 = vpop.permute.xlu0 %627
  %v630 = vmul.f32 %v612, %v628
  %s631 = sadd.s32 %s34, 7
  %v632 = vstv %s631
  %vm633 = vcmp.gt.s32.totalorder %v33, %v632
  %v634 = vsel %vm633, 1, 0
  %635 = vset.pattern.permute.xlu0 0
  %636 = vperm.xlu0 %635, %v634
  %v637 = vpop.permute.xlu0 %636
  %vm638 = vcmp.eq.s32.totalorder %v637, 1
  %v639 = vsel %vm638, %v630, %v564
  %v640 = vsel %vm638, %v624, %v565
  %642 = vrot.lane.b32.xlu0 %v639, 32
  %v643 = vpop.permute.xlu0 %642
  %vm645 = vcmask 257024
  %646 = vst.msk [vmem:[#allocation2] sm:$0xf] %vm645, %v643
  %648 = vrot.lane.b32.xlu0 %v640, 96
  %v649 = vpop.permute.xlu0 %648
  %651 = vst.msk [vmem:[#allocation3] sm:$0xf] %vm645, %v649
  // Predicated region
  $region26: #{baseline_lstm_regressor_forward.7} parent=0 // pred_check
    %p652 = pneg %p22
  $region27: #{baseline_lstm_regressor_forward.7} parent=0 // pred_check_branch
    %654 = sbr.rel (%p652) target = $region29
  $region28: #{baseline_lstm_regressor_forward.7} parent=0 // pred_region
    %v655 = vld [vmem:[%s3] sm:$0xff]
    %v656 = vld [vmem:[%s3 + $0x8] sm:$0xff]
    %v657 = vld [vmem:[%s3 + $0x10] sm:$0xff]
    %v658 = vld [vmem:[%s3 + $0x18] sm:$0xff]
    %v659 = vld [vmem:[#allocation4] sm:$0x1]
    %v661 = vperm.slane %v659, 0
    %v663 = vsel %vm38, %v643, 0
    %665 = vmatpush.msra.mxu0 0.0
    %666 = vmatpush.msra.mxu0 0.0
    %667 = vmatpush.msra.mxu0 0.0
    %668 = vmatpush.msra.mxu0 0.0
    %669 = vmatpush.msra.mxu0 0.0
    %670 = vmatpush.msra.mxu0 0.0
    %671 = vmatpush.msra.mxu0 0.0
    %672 = vmatpush.msra.mxu0 0.0
    %673 = vmatpush.msra.mxu0 0.0
    %674 = vmatpush.msra.mxu0 0.0
    %675 = vmatpush.msra.mxu0 0.0
    %676 = vmatpush.msra.mxu0 0.0
    %677 = vmatpush.msra.mxu0 %v658
    %678 = vmatpush.msra.mxu0 %v657
    %679 = vmatpush.msra.mxu0 %v656
    %680 = vmatpush.msra.mxu0 %v655
    %681 = vmatmul.f32.gmra.mxu0 %v663
    %v682 = vpop.f32.mrf.mxu0
    %v683 = vadd.f32 %v661, %v682
    %684 = vdwg.mxu0
    %vm685 = vcmask 3072
    %686 = vst.msk [vmem:[%s5] sm:$0xf] %vm685, %v683
  $region29: #{baseline_lstm_regressor_forward.7} parent=0 // pred_fallthru
    _
  // Predicated region
  $region30: #{baseline_lstm_regressor_forward.7} parent=0 // pred_check
    _
  $region31: #{baseline_lstm_regressor_forward.7} parent=0 // pred_check_branch
    %688 = sbr.rel (0) target = $region33
  $region32: #{baseline_lstm_regressor_forward.7} parent=0 // pred_region
    _
  $region33: #{baseline_lstm_regressor_forward.7} parent=0 // pred_fallthru
    _
  // Predicated region
  $region34: #{baseline_lstm_regressor_forward.7} parent=0 // pred_check
    _
  $region35: #{baseline_lstm_regressor_forward.7} parent=0 // pred_check_branch
    %690 = sbr.rel (0) target = $region37
  $region36: #{baseline_lstm_regressor_forward.7} parent=0 // pred_region
    _
  $region37: #{baseline_lstm_regressor_forward.7} parent=0 // pred_fallthru
    _

// kernel: baseline_lstm_regressor_forward.5
$region0: #{baseline_lstm_regressor_forward.5}
  #allocation0 [shape = 'u32[]', space=smem, size = 0x4, offset = 0x4, fixed_abs, tag = 'smem constant byte address 0x4 - core index']
  #allocation1 [shape = 'u32[72,128]{1,0:T(1,128)}', space=vmem, size = 0x9000, scoped, tag = 'internal scratch']
  #allocation2 [shape = 'f32[4,32]{1,0:T(4,128)}', space=vmem, size = 0x800, scoped, tag = 'scratch operand']
  #allocation3 [shape = 'f32[4,32]{1,0:T(4,128)}', space=vmem, size = 0x800, scoped, tag = 'scratch operand']
  %s0 = inlined_call_operand.vmem [shape: f32[8,4,128], index: 0, kind: input, shape index: {}]
  %s1 = inlined_call_operand.vmem [shape: s32[4,1], index: 1, kind: input, shape index: {}]
  %s2 = inlined_call_operand.vmem [shape: f32[32,128], index: 2, kind: input, shape index: {}]
  %s3 = inlined_call_operand.vmem [shape: f32[8,4,32], index: 3, kind: output, shape index: {}]
  %s4 = sld [smem:[#allocation0]]
  $region26: #{baseline_lstm_regressor_forward.5} parent=0
    _
  %s6 = ssub.s32 1, %s4
  %s7 = scalar_select 0, %s6, %s4
  // Predicated region
  $region2: #{baseline_lstm_regressor_forward.5} parent=0 // pred_check
    _
  $region3: #{baseline_lstm_regressor_forward.5} parent=0 // pred_check_branch
    %9 = sbr.rel (0) target = $region5
  $region4: #{baseline_lstm_regressor_forward.5} parent=0 // pred_region
    _
  $region5: #{baseline_lstm_regressor_forward.5} parent=0 // pred_fallthru
    _
  // Predicated region
  $region6: #{baseline_lstm_regressor_forward.5} parent=0 // pred_check
    _
  $region7: #{baseline_lstm_regressor_forward.5} parent=0 // pred_check_branch
    %11 = sbr.rel (0) target = $region9
  $region8: #{baseline_lstm_regressor_forward.5} parent=0 // pred_region
    _
  $region9: #{baseline_lstm_regressor_forward.5} parent=0 // pred_fallthru
    _
  // Predicated region
  $region10: #{baseline_lstm_regressor_forward.5} parent=0 // pred_check
    _
  $region11: #{baseline_lstm_regressor_forward.5} parent=0 // pred_check_branch
    %13 = sbr.rel (0) target = $region13
  $region12: #{baseline_lstm_regressor_forward.5} parent=0 // pred_region
    _
  $region13: #{baseline_lstm_regressor_forward.5} parent=0 // pred_fallthru
    _
  %p14 = scmp.eq.s32.totalorder 0, 0
  // Predicated region
  $region14: #{baseline_lstm_regressor_forward.5} parent=0 // pred_check
    %p15 = pneg %p14
  $region15: #{baseline_lstm_regressor_forward.5} parent=0 // pred_check_branch
    %17 = sbr.rel (%p15) target = $region17
  $region16: #{baseline_lstm_regressor_forward.5} parent=0 // pred_region
    %vm18 = vcmask 257024
    %19 = vst.msk [vmem:[#allocation2] sm:$0xf] %vm18, 0.0
    %20 = vst.msk [vmem:[#allocation3] sm:$0xf] %vm18, 0.0
  $region17: #{baseline_lstm_regressor_forward.5} parent=0 // pred_fallthru
    _
  %v21 = vld [vmem:[%s2] sm:$0xff]
  %v22 = vld [vmem:[%s2 + $0x8] sm:$0xff]
  %v23 = vld [vmem:[%s2 + $0x10] sm:$0xff]
  %v24 = vld [vmem:[%s2 + $0x18] sm:$0xff]
  %v25 = vld [vmem:[%s1] sm:$0xf]
  %s26 = smul.u32 0, 8
  %v27 = vld [vmem:[#allocation2] sm:$0xf]
  %v28 = vld [vmem:[#allocation3] sm:$0xf]
  %v29 = vld [vmem:[%s0] sm:$0xf]
  %vm30 = vcmask 261120
  %v32 = vsel %vm30, %v27, 0
  %34 = vmatpush.msra.mxu0 0.0
  %35 = vmatpush.msra.mxu0 0.0
  %36 = vmatpush.msra.mxu0 0.0
  %37 = vmatpush.msra.mxu0 0.0
  %38 = vmatpush.msra.mxu0 0.0
  %39 = vmatpush.msra.mxu0 0.0
  %40 = vmatpush.msra.mxu0 0.0
  %41 = vmatpush.msra.mxu0 0.0
  %42 = vmatpush.msra.mxu0 0.0
  %43 = vmatpush.msra.mxu0 0.0
  %44 = vmatpush.msra.mxu0 0.0
  %45 = vmatpush.msra.mxu0 0.0
  %46 = vmatpush.msra.mxu0 %v24
  %47 = vmatpush.msra.mxu0 %v23
  %48 = vmatpush.msra.mxu0 %v22
  %49 = vmatpush.msra.mxu0 %v21
  %50 = vmatmul.f32.gmra.mxu0 %v32
  %v51 = vpop.f32.mrf.mxu0
  %v52 = vadd.f32 0.0, %v51
  %53 = vdwg.mxu0
  %v54 = vadd.f32 %v29, %v52
  %v55 = vxor.u32 %v54, 2147483648
  %v56 = vmul.f32 %v55, 1.442695
  %v57 = vpow.pop %v56
  %v58 = vadd.f32 %v57, 1.0
  %v59 = vrcp.pop %v58
  %v60 = vmul.f32 %v58, %v59
  %v61 = vsub.f32 1.0, %v60
  %v62 = vmul.f32 %v59, %v61
  %v63 = vadd.f32 %v59, %v62
  %vm64 = vweird.f32 %v58
  %vm65 = vweird.f32 %v59
  %vm66 = vmor %vm64, %vm65
  %v67 = vsel %vm66, %v59, %v63
  %v68 = vand.u32 2147483647, %v58
  %vm69 = vcmp.eq.f32.partialorder %v68, 8.507059e+37
  %v70 = vand.u32 %v58, 2147483648
  %v71 = vor.u32 1.1754944e-38, %v70
  %v72 = vsel %vm69, %v71, %v67
  %v73 = vmul.f32 1.0, %v72
  %v74 = vtanh.pop %v54
  %76 = vrot.lane.b32.xlu0 %v28, 32
  %v77 = vpop.permute.xlu0 %76
  %v79 = vmul.f32 %v73, %v77
  %81 = vrot.lane.b32.xlu0 %v74, 64
  %v82 = vpop.permute.xlu0 %81
  %v84 = vmul.f32 %v73, %v82
  %86 = vrot.lane.b32.xlu0 %v84, 32
  %v87 = vpop.permute.xlu0 %86
  %v89 = vadd.f32 %v79, %v87
  %v90 = vtanh.pop %v89
  %92 = vrot.lane.b32.xlu0 %v90, 64
  %v93 = vpop.permute.xlu0 %92
  %v95 = vmul.f32 %v73, %v93
  %v96 = vstv %s26
  %vm97 = vcmp.gt.s32.totalorder %v25, %v96
  %v98 = vsel %vm97, 1, 0
  %99 = vset.pattern.permute.xlu0 0
  %100 = vperm.xlu0 %99, %v98
  %v101 = vpop.permute.xlu0 %100
  %vm102 = vcmp.eq.s32.totalorder %v101, 1
  %103 = vrot.lane.b32.xlu0 %v27, 96
  %v104 = vpop.permute.xlu0 %103
  %v106 = vsel %vm102, %v95, %v104
  %v107 = vsel %vm102, %v89, %v77
  %109 = vrot.lane.b32.xlu0 %v106, 32
  %v110 = vpop.permute.xlu0 %109
  %vm112 = vcmask 257024
  %113 = vst.msk [vmem:[%s3] sm:$0xf] %vm112, %v110
  %s114 = scalar_lea.vmem %s0, 4
  %v115 = vld [vmem:[%s114] sm:$0xf]
  %v116 = vsel %vm30, %v110, 0
  %118 = vmatpush.msra.mxu0 0.0
  %119 = vmatpush.msra.mxu0 0.0
  %120 = vmatpush.msra.mxu0 0.0
  %121 = vmatpush.msra.mxu0 0.0
  %122 = vmatpush.msra.mxu0 0.0
  %123 = vmatpush.msra.mxu0 0.0
  %124 = vmatpush.msra.mxu0 0.0
  %125 = vmatpush.msra.mxu0 0.0
  %126 = vmatpush.msra.mxu0 0.0
  %127 = vmatpush.msra.mxu0 0.0
  %128 = vmatpush.msra.mxu0 0.0
  %129 = vmatpush.msra.mxu0 0.0
  %130 = vmatpush.msra.mxu0 %v24
  %131 = vmatpush.msra.mxu0 %v23
  %132 = vmatpush.msra.mxu0 %v22
  %133 = vmatpush.msra.mxu0 %v21
  %134 = vmatmul.f32.gmra.mxu0 %v116
  %v135 = vpop.f32.mrf.mxu0
  %v136 = vadd.f32 0.0, %v135
  %137 = vdwg.mxu0
  %v138 = vadd.f32 %v115, %v136
  %v139 = vxor.u32 %v138, 2147483648
  %v140 = vmul.f32 %v139, 1.442695
  %v141 = vpow.pop %v140
  %v142 = vadd.f32 %v141, 1.0
  %v143 = vrcp.pop %v142
  %v144 = vmul.f32 %v142, %v143
  %v145 = vsub.f32 1.0, %v144
  %v146 = vmul.f32 %v143, %v145
  %v147 = vadd.f32 %v143, %v146
  %vm148 = vweird.f32 %v142
  %vm149 = vweird.f32 %v143
  %vm150 = vmor %vm148, %vm149
  %v151 = vsel %vm150, %v143, %v147
  %v152 = vand.u32 2147483647, %v142
  %vm153 = vcmp.eq.f32.partialorder %v152, 8.507059e+37
  %v154 = vand.u32 %v142, 2147483648
  %v155 = vor.u32 1.1754944e-38, %v154
  %v156 = vsel %vm153, %v155, %v151
  %v157 = vmul.f32 1.0, %v156
  %v158 = vtanh.pop %v138
  %v159 = vmul.f32 %v157, %v107
  %161 = vrot.lane.b32.xlu0 %v158, 64
  %v162 = vpop.permute.xlu0 %161
  %v164 = vmul.f32 %v157, %v162
  %166 = vrot.lane.b32.xlu0 %v164, 32
  %v167 = vpop.permute.xlu0 %166
  %v169 = vadd.f32 %v159, %v167
  %v170 = vtanh.pop %v169
  %172 = vrot.lane.b32.xlu0 %v170, 64
  %v173 = vpop.permute.xlu0 %172
  %v175 = vmul.f32 %v157, %v173
  %s176 = sadd.s32 %s26, 1
  %v177 = vstv %s176
  %vm178 = vcmp.gt.s32.totalorder %v25, %v177
  %v179 = vsel %vm178, 1, 0
  %180 = vset.pattern.permute.xlu0 0
  %181 = vperm.xlu0 %180, %v179
  %v182 = vpop.permute.xlu0 %181
  %vm183 = vcmp.eq.s32.totalorder %v182, 1
  %v184 = vsel %vm183, %v175, %v106
  %v185 = vsel %vm183, %v169, %v107
  %187 = vrot.lane.b32.xlu0 %v184, 32
  %v188 = vpop.permute.xlu0 %187
  %s190 = scalar_lea.vmem %s3, 4
  %191 = vst.msk [vmem:[%s190] sm:$0xf] %vm112, %v188
  %s192 = scalar_lea.vmem %s0, 8
  %v193 = vld [vmem:[%s192] sm:$0xf]
  %v194 = vsel %vm30, %v188, 0
  %196 = vmatpush.msra.mxu0 0.0
  %197 = vmatpush.msra.mxu0 0.0
  %198 = vmatpush.msra.mxu0 0.0
  %199 = vmatpush.msra.mxu0 0.0
  %200 = vmatpush.msra.mxu0 0.0
  %201 = vmatpush.msra.mxu0 0.0
  %202 = vmatpush.msra.mxu0 0.0
  %203 = vmatpush.msra.mxu0 0.0
  %204 = vmatpush.msra.mxu0 0.0
  %205 = vmatpush.msra.mxu0 0.0
  %206 = vmatpush.msra.mxu0 0.0
  %207 = vmatpush.msra.mxu0 0.0
  %208 = vmatpush.msra.mxu0 %v24
  %209 = vmatpush.msra.mxu0 %v23
  %210 = vmatpush.msra.mxu0 %v22
  %211 = vmatpush.msra.mxu0 %v21
  %212 = vmatmul.f32.gmra.mxu0 %v194
  %v213 = vpop.f32.mrf.mxu0
  %v214 = vadd.f32 0.0, %v213
  %215 = vdwg.mxu0
  %v216 = vadd.f32 %v193, %v214
  %v217 = vxor.u32 %v216, 2147483648
  %v218 = vmul.f32 %v217, 1.442695
  %v219 = vpow.pop %v218
  %v220 = vadd.f32 %v219, 1.0
  %v221 = vrcp.pop %v220
  %v222 = vmul.f32 %v220, %v221
  %v223 = vsub.f32 1.0, %v222
  %v224 = vmul.f32 %v221, %v223
  %v225 = vadd.f32 %v221, %v224
  %vm226 = vweird.f32 %v220
  %vm227 = vweird.f32 %v221
  %vm228 = vmor %vm226, %vm227
  %v229 = vsel %vm228, %v221, %v225
  %v230 = vand.u32 2147483647, %v220
  %vm231 = vcmp.eq.f32.partialorder %v230, 8.507059e+37
  %v232 = vand.u32 %v220, 2147483648
  %v233 = vor.u32 1.1754944e-38, %v232
  %v234 = vsel %vm231, %v233, %v229
  %v235 = vmul.f32 1.0, %v234
  %v236 = vtanh.pop %v216
  %v237 = vmul.f32 %v235, %v185
  %239 = vrot.lane.b32.xlu0 %v236, 64
  %v240 = vpop.permute.xlu0 %239
  %v242 = vmul.f32 %v235, %v240
  %244 = vrot.lane.b32.xlu0 %v242, 32
  %v245 = vpop.permute.xlu0 %244
  %v247 = vadd.f32 %v237, %v245
  %v248 = vtanh.pop %v247
  %250 = vrot.lane.b32.xlu0 %v248, 64
  %v251 = vpop.permute.xlu0 %250
  %v253 = vmul.f32 %v235, %v251
  %s254 = sadd.s32 %s26, 2
  %v255 = vstv %s254
  %vm256 = vcmp.gt.s32.totalorder %v25, %v255
  %v257 = vsel %vm256, 1, 0
  %258 = vset.pattern.permute.xlu0 0
  %259 = vperm.xlu0 %258, %v257
  %v260 = vpop.permute.xlu0 %259
  %vm261 = vcmp.eq.s32.totalorder %v260, 1
  %v262 = vsel %vm261, %v253, %v184
  %v263 = vsel %vm261, %v247, %v185
  %265 = vrot.lane.b32.xlu0 %v262, 32
  %v266 = vpop.permute.xlu0 %265
  %s268 = scalar_lea.vmem %s3, 8
  %269 = vst.msk [vmem:[%s268] sm:$0xf] %vm112, %v266
  %s270 = scalar_lea.vmem %s0, 12
  %v271 = vld [vmem:[%s270] sm:$0xf]
  %v272 = vsel %vm30, %v266, 0
  %274 = vmatpush.msra.mxu0 0.0
  %275 = vmatpush.msra.mxu0 0.0
  %276 = vmatpush.msra.mxu0 0.0
  %277 = vmatpush.msra.mxu0 0.0
  %278 = vmatpush.msra.mxu0 0.0
  %279 = vmatpush.msra.mxu0 0.0
  %280 = vmatpush.msra.mxu0 0.0
  %281 = vmatpush.msra.mxu0 0.0
  %282 = vmatpush.msra.mxu0 0.0
  %283 = vmatpush.msra.mxu0 0.0
  %284 = vmatpush.msra.mxu0 0.0
  %285 = vmatpush.msra.mxu0 0.0
  %286 = vmatpush.msra.mxu0 %v24
  %287 = vmatpush.msra.mxu0 %v23
  %288 = vmatpush.msra.mxu0 %v22
  %289 = vmatpush.msra.mxu0 %v21
  %290 = vmatmul.f32.gmra.mxu0 %v272
  %v291 = vpop.f32.mrf.mxu0
  %v292 = vadd.f32 0.0, %v291
  %293 = vdwg.mxu0
  %v294 = vadd.f32 %v271, %v292
  %v295 = vxor.u32 %v294, 2147483648
  %v296 = vmul.f32 %v295, 1.442695
  %v297 = vpow.pop %v296
  %v298 = vadd.f32 %v297, 1.0
  %v299 = vrcp.pop %v298
  %v300 = vmul.f32 %v298, %v299
  %v301 = vsub.f32 1.0, %v300
  %v302 = vmul.f32 %v299, %v301
  %v303 = vadd.f32 %v299, %v302
  %vm304 = vweird.f32 %v298
  %vm305 = vweird.f32 %v299
  %vm306 = vmor %vm304, %vm305
  %v307 = vsel %vm306, %v299, %v303
  %v308 = vand.u32 2147483647, %v298
  %vm309 = vcmp.eq.f32.partialorder %v308, 8.507059e+37
  %v310 = vand.u32 %v298, 2147483648
  %v311 = vor.u32 1.1754944e-38, %v310
  %v312 = vsel %vm309, %v311, %v307
  %v313 = vmul.f32 1.0, %v312
  %v314 = vtanh.pop %v294
  %v315 = vmul.f32 %v313, %v263
  %317 = vrot.lane.b32.xlu0 %v314, 64
  %v318 = vpop.permute.xlu0 %317
  %v320 = vmul.f32 %v313, %v318
  %322 = vrot.lane.b32.xlu0 %v320, 32
  %v323 = vpop.permute.xlu0 %322
  %v325 = vadd.f32 %v315, %v323
  %v326 = vtanh.pop %v325
  %328 = vrot.lane.b32.xlu0 %v326, 64
  %v329 = vpop.permute.xlu0 %328
  %v331 = vmul.f32 %v313, %v329
  %s332 = sadd.s32 %s26, 3
  %v333 = vstv %s332
  %vm334 = vcmp.gt.s32.totalorder %v25, %v333
  %v335 = vsel %vm334, 1, 0
  %336 = vset.pattern.permute.xlu0 0
  %337 = vperm.xlu0 %336, %v335
  %v338 = vpop.permute.xlu0 %337
  %vm339 = vcmp.eq.s32.totalorder %v338, 1
  %v340 = vsel %vm339, %v331, %v262
  %v341 = vsel %vm339, %v325, %v263
  %343 = vrot.lane.b32.xlu0 %v340, 32
  %v344 = vpop.permute.xlu0 %343
  %s346 = scalar_lea.vmem %s3, 12
  %347 = vst.msk [vmem:[%s346] sm:$0xf] %vm112, %v344
  %s348 = scalar_lea.vmem %s0, 16
  %v349 = vld [vmem:[%s348] sm:$0xf]
  %v350 = vsel %vm30, %v344, 0
  %352 = vmatpush.msra.mxu0 0.0
  %353 = vmatpush.msra.mxu0 0.0
  %354 = vmatpush.msra.mxu0 0.0
  %355 = vmatpush.msra.mxu0 0.0
  %356 = vmatpush.msra.mxu0 0.0
  %357 = vmatpush.msra.mxu0 0.0
  %358 = vmatpush.msra.mxu0 0.0
  %359 = vmatpush.msra.mxu0 0.0
  %360 = vmatpush.msra.mxu0 0.0
  %361 = vmatpush.msra.mxu0 0.0
  %362 = vmatpush.msra.mxu0 0.0
  %363 = vmatpush.msra.mxu0 0.0
  %364 = vmatpush.msra.mxu0 %v24
  %365 = vmatpush.msra.mxu0 %v23
  %366 = vmatpush.msra.mxu0 %v22
  %367 = vmatpush.msra.mxu0 %v21
  %368 = vmatmul.f32.gmra.mxu0 %v350
  %v369 = vpop.f32.mrf.mxu0
  %v370 = vadd.f32 0.0, %v369
  %371 = vdwg.mxu0
  %v372 = vadd.f32 %v349, %v370
  %v373 = vxor.u32 %v372, 2147483648
  %v374 = vmul.f32 %v373, 1.442695
  %v375 = vpow.pop %v374
  %v376 = vadd.f32 %v375, 1.0
  %v377 = vrcp.pop %v376
  %v378 = vmul.f32 %v376, %v377
  %v379 = vsub.f32 1.0, %v378
  %v380 = vmul.f32 %v377, %v379
  %v381 = vadd.f32 %v377, %v380
  %vm382 = vweird.f32 %v376
  %vm383 = vweird.f32 %v377
  %vm384 = vmor %vm382, %vm383
  %v385 = vsel %vm384, %v377, %v381
  %v386 = vand.u32 2147483647, %v376
  %vm387 = vcmp.eq.f32.partialorder %v386, 8.507059e+37
  %v388 = vand.u32 %v376, 2147483648
  %v389 = vor.u32 1.1754944e-38, %v388
  %v390 = vsel %vm387, %v389, %v385
  %v391 = vmul.f32 1.0, %v390
  %v392 = vtanh.pop %v372
  %v393 = vmul.f32 %v391, %v341
  %395 = vrot.lane.b32.xlu0 %v392, 64
  %v396 = vpop.permute.xlu0 %395
  %v398 = vmul.f32 %v391, %v396
  %400 = vrot.lane.b32.xlu0 %v398, 32
  %v401 = vpop.permute.xlu0 %400
  %v403 = vadd.f32 %v393, %v401
  %v404 = vtanh.pop %v403
  %406 = vrot.lane.b32.xlu0 %v404, 64
  %v407 = vpop.permute.xlu0 %406
  %v409 = vmul.f32 %v391, %v407
  %s410 = sadd.s32 %s26, 4
  %v411 = vstv %s410
  %vm412 = vcmp.gt.s32.totalorder %v25, %v411
  %v413 = vsel %vm412, 1, 0
  %414 = vset.pattern.permute.xlu0 0
  %415 = vperm.xlu0 %414, %v413
  %v416 = vpop.permute.xlu0 %415
  %vm417 = vcmp.eq.s32.totalorder %v416, 1
  %v418 = vsel %vm417, %v409, %v340
  %v419 = vsel %vm417, %v403, %v341
  %421 = vrot.lane.b32.xlu0 %v418, 32
  %v422 = vpop.permute.xlu0 %421
  %s424 = scalar_lea.vmem %s3, 16
  %425 = vst.msk [vmem:[%s424] sm:$0xf] %vm112, %v422
  %s426 = scalar_lea.vmem %s0, 20
  %v427 = vld [vmem:[%s426] sm:$0xf]
  %v428 = vsel %vm30, %v422, 0
  %430 = vmatpush.msra.mxu0 0.0
  %431 = vmatpush.msra.mxu0 0.0
  %432 = vmatpush.msra.mxu0 0.0
  %433 = vmatpush.msra.mxu0 0.0
  %434 = vmatpush.msra.mxu0 0.0
  %435 = vmatpush.msra.mxu0 0.0
  %436 = vmatpush.msra.mxu0 0.0
  %437 = vmatpush.msra.mxu0 0.0
  %438 = vmatpush.msra.mxu0 0.0
  %439 = vmatpush.msra.mxu0 0.0
  %440 = vmatpush.msra.mxu0 0.0
  %441 = vmatpush.msra.mxu0 0.0
  %442 = vmatpush.msra.mxu0 %v24
  %443 = vmatpush.msra.mxu0 %v23
  %444 = vmatpush.msra.mxu0 %v22
  %445 = vmatpush.msra.mxu0 %v21
  %446 = vmatmul.f32.gmra.mxu0 %v428
  %v447 = vpop.f32.mrf.mxu0
  %v448 = vadd.f32 0.0, %v447
  %449 = vdwg.mxu0
  %v450 = vadd.f32 %v427, %v448
  %v451 = vxor.u32 %v450, 2147483648
  %v452 = vmul.f32 %v451, 1.442695
  %v453 = vpow.pop %v452
  %v454 = vadd.f32 %v453, 1.0
  %v455 = vrcp.pop %v454
  %v456 = vmul.f32 %v454, %v455
  %v457 = vsub.f32 1.0, %v456
  %v458 = vmul.f32 %v455, %v457
  %v459 = vadd.f32 %v455, %v458
  %vm460 = vweird.f32 %v454
  %vm461 = vweird.f32 %v455
  %vm462 = vmor %vm460, %vm461
  %v463 = vsel %vm462, %v455, %v459
  %v464 = vand.u32 2147483647, %v454
  %vm465 = vcmp.eq.f32.partialorder %v464, 8.507059e+37
  %v466 = vand.u32 %v454, 2147483648
  %v467 = vor.u32 1.1754944e-38, %v466
  %v468 = vsel %vm465, %v467, %v463
  %v469 = vmul.f32 1.0, %v468
  %v470 = vtanh.pop %v450
  %v471 = vmul.f32 %v469, %v419
  %473 = vrot.lane.b32.xlu0 %v470, 64
  %v474 = vpop.permute.xlu0 %473
  %v476 = vmul.f32 %v469, %v474
  %478 = vrot.lane.b32.xlu0 %v476, 32
  %v479 = vpop.permute.xlu0 %478
  %v481 = vadd.f32 %v471, %v479
  %v482 = vtanh.pop %v481
  %484 = vrot.lane.b32.xlu0 %v482, 64
  %v485 = vpop.permute.xlu0 %484
  %v487 = vmul.f32 %v469, %v485
  %s488 = sadd.s32 %s26, 5
  %v489 = vstv %s488
  %vm490 = vcmp.gt.s32.totalorder %v25, %v489
  %v491 = vsel %vm490, 1, 0
  %492 = vset.pattern.permute.xlu0 0
  %493 = vperm.xlu0 %492, %v491
  %v494 = vpop.permute.xlu0 %493
  %vm495 = vcmp.eq.s32.totalorder %v494, 1
  %v496 = vsel %vm495, %v487, %v418
  %v497 = vsel %vm495, %v481, %v419
  %499 = vrot.lane.b32.xlu0 %v496, 32
  %v500 = vpop.permute.xlu0 %499
  %s502 = scalar_lea.vmem %s3, 20
  %503 = vst.msk [vmem:[%s502] sm:$0xf] %vm112, %v500
  %s504 = scalar_lea.vmem %s0, 24
  %v505 = vld [vmem:[%s504] sm:$0xf]
  %v506 = vsel %vm30, %v500, 0
  %508 = vmatpush.msra.mxu0 0.0
  %509 = vmatpush.msra.mxu0 0.0
  %510 = vmatpush.msra.mxu0 0.0
  %511 = vmatpush.msra.mxu0 0.0
  %512 = vmatpush.msra.mxu0 0.0
  %513 = vmatpush.msra.mxu0 0.0
  %514 = vmatpush.msra.mxu0 0.0
  %515 = vmatpush.msra.mxu0 0.0
  %516 = vmatpush.msra.mxu0 0.0
  %517 = vmatpush.msra.mxu0 0.0
  %518 = vmatpush.msra.mxu0 0.0
  %519 = vmatpush.msra.mxu0 0.0
  %520 = vmatpush.msra.mxu0 %v24
  %521 = vmatpush.msra.mxu0 %v23
  %522 = vmatpush.msra.mxu0 %v22
  %523 = vmatpush.msra.mxu0 %v21
  %524 = vmatmul.f32.gmra.mxu0 %v506
  %v525 = vpop.f32.mrf.mxu0
  %v526 = vadd.f32 0.0, %v525
  %527 = vdwg.mxu0
  %v528 = vadd.f32 %v505, %v526
  %v529 = vxor.u32 %v528, 2147483648
  %v530 = vmul.f32 %v529, 1.442695
  %v531 = vpow.pop %v530
  %v532 = vadd.f32 %v531, 1.0
  %v533 = vrcp.pop %v532
  %v534 = vmul.f32 %v532, %v533
  %v535 = vsub.f32 1.0, %v534
  %v536 = vmul.f32 %v533, %v535
  %v537 = vadd.f32 %v533, %v536
  %vm538 = vweird.f32 %v532
  %vm539 = vweird.f32 %v533
  %vm540 = vmor %vm538, %vm539
  %v541 = vsel %vm540, %v533, %v537
  %v542 = vand.u32 2147483647, %v532
  %vm543 = vcmp.eq.f32.partialorder %v542, 8.507059e+37
  %v544 = vand.u32 %v532, 2147483648
  %v545 = vor.u32 1.1754944e-38, %v544
  %v546 = vsel %vm543, %v545, %v541
  %v547 = vmul.f32 1.0, %v546
  %v548 = vtanh.pop %v528
  %v549 = vmul.f32 %v547, %v497
  %551 = vrot.lane.b32.xlu0 %v548, 64
  %v552 = vpop.permute.xlu0 %551
  %v554 = vmul.f32 %v547, %v552
  %556 = vrot.lane.b32.xlu0 %v554, 32
  %v557 = vpop.permute.xlu0 %556
  %v559 = vadd.f32 %v549, %v557
  %v560 = vtanh.pop %v559
  %562 = vrot.lane.b32.xlu0 %v560, 64
  %v563 = vpop.permute.xlu0 %562
  %v565 = vmul.f32 %v547, %v563
  %s566 = sadd.s32 %s26, 6
  %v567 = vstv %s566
  %vm568 = vcmp.gt.s32.totalorder %v25, %v567
  %v569 = vsel %vm568, 1, 0
  %570 = vset.pattern.permute.xlu0 0
  %571 = vperm.xlu0 %570, %v569
  %v572 = vpop.permute.xlu0 %571
  %vm573 = vcmp.eq.s32.totalorder %v572, 1
  %v574 = vsel %vm573, %v565, %v496
  %v575 = vsel %vm573, %v559, %v497
  %577 = vrot.lane.b32.xlu0 %v574, 32
  %v578 = vpop.permute.xlu0 %577
  %s580 = scalar_lea.vmem %s3, 24
  %581 = vst.msk [vmem:[%s580] sm:$0xf] %vm112, %v578
  %s582 = scalar_lea.vmem %s0, 28
  %v583 = vld [vmem:[%s582] sm:$0xf]
  %v584 = vsel %vm30, %v578, 0
  %586 = vmatpush.msra.mxu0 0.0
  %587 = vmatpush.msra.mxu0 0.0
  %588 = vmatpush.msra.mxu0 0.0
  %589 = vmatpush.msra.mxu0 0.0
  %590 = vmatpush.msra.mxu0 0.0
  %591 = vmatpush.msra.mxu0 0.0
  %592 = vmatpush.msra.mxu0 0.0
  %593 = vmatpush.msra.mxu0 0.0
  %594 = vmatpush.msra.mxu0 0.0
  %595 = vmatpush.msra.mxu0 0.0
  %596 = vmatpush.msra.mxu0 0.0
  %597 = vmatpush.msra.mxu0 0.0
  %598 = vmatpush.msra.mxu0 %v24
  %599 = vmatpush.msra.mxu0 %v23
  %600 = vmatpush.msra.mxu0 %v22
  %601 = vmatpush.msra.mxu0 %v21
  %602 = vmatmul.f32.gmra.mxu0 %v584
  %v603 = vpop.f32.mrf.mxu0
  %v604 = vadd.f32 0.0, %v603
  %605 = vdwg.mxu0
  %v606 = vadd.f32 %v583, %v604
  %v607 = vxor.u32 %v606, 2147483648
  %v608 = vmul.f32 %v607, 1.442695
  %v609 = vpow.pop %v608
  %v610 = vadd.f32 %v609, 1.0
  %v611 = vrcp.pop %v610
  %v612 = vmul.f32 %v610, %v611
  %v613 = vsub.f32 1.0, %v612
  %v614 = vmul.f32 %v611, %v613
  %v615 = vadd.f32 %v611, %v614
  %vm616 = vweird.f32 %v610
  %vm617 = vweird.f32 %v611
  %vm618 = vmor %vm616, %vm617
  %v619 = vsel %vm618, %v611, %v615
  %v620 = vand.u32 2147483647, %v610
  %vm621 = vcmp.eq.f32.partialorder %v620, 8.507059e+37
  %v622 = vand.u32 %v610, 2147483648
  %v623 = vor.u32 1.1754944e-38, %v622
  %v624 = vsel %vm621, %v623, %v619
  %v625 = vmul.f32 1.0, %v624
  %v626 = vtanh.pop %v606
  %v627 = vmul.f32 %v625, %v575
  %629 = vrot.lane.b32.xlu0 %v626, 64
  %v630 = vpop.permute.xlu0 %629
  %v632 = vmul.f32 %v625, %v630
  %634 = vrot.lane.b32.xlu0 %v632, 32
  %v635 = vpop.permute.xlu0 %634
  %v637 = vadd.f32 %v627, %v635
  %v638 = vtanh.pop %v637
  %640 = vrot.lane.b32.xlu0 %v638, 64
  %v641 = vpop.permute.xlu0 %640
  %v643 = vmul.f32 %v625, %v641
  %s644 = sadd.s32 %s26, 7
  %v645 = vstv %s644
  %vm646 = vcmp.gt.s32.totalorder %v25, %v645
  %v647 = vsel %vm646, 1, 0
  %648 = vset.pattern.permute.xlu0 0
  %649 = vperm.xlu0 %648, %v647
  %v650 = vpop.permute.xlu0 %649
  %vm651 = vcmp.eq.s32.totalorder %v650, 1
  %v652 = vsel %vm651, %v643, %v574
  %v653 = vsel %vm651, %v637, %v575
  %655 = vrot.lane.b32.xlu0 %v652, 32
  %v656 = vpop.permute.xlu0 %655
  %s658 = scalar_lea.vmem %s3, 28
  %659 = vst.msk [vmem:[%s658] sm:$0xf] %vm112, %v656
  %660 = vst.msk [vmem:[#allocation2] sm:$0xf] %vm112, %v656
  %662 = vrot.lane.b32.xlu0 %v653, 96
  %v663 = vpop.permute.xlu0 %662
  %665 = vst.msk [vmem:[#allocation3] sm:$0xf] %vm112, %v663
  // Predicated region
  $region18: #{baseline_lstm_regressor_forward.5} parent=0 // pred_check
    _
  $region19: #{baseline_lstm_regressor_forward.5} parent=0 // pred_check_branch
    %667 = sbr.rel (0) target = $region21
  $region20: #{baseline_lstm_regressor_forward.5} parent=0 // pred_region
    _
  $region21: #{baseline_lstm_regressor_forward.5} parent=0 // pred_fallthru
    _
  // Predicated region
  $region22: #{baseline_lstm_regressor_forward.5} parent=0 // pred_check
    _
  $region23: #{baseline_lstm_regressor_forward.5} parent=0 // pred_check_branch
    %669 = sbr.rel (0) target = $region25
  $region24: #{baseline_lstm_regressor_forward.5} parent=0 // pred_region
    _
  $region25: #{baseline_lstm_regressor_forward.5} parent=0 // pred_fallthru
    _

</llo_original>
